<compile_context>
chip_gen: v5e
topology: v5e:2x2
jax: 0.10.0
libtpu: 0.0.40
codegen_flags: <defaults>
</compile_context>

<pallas_src>
import functools
import math

import jax
import jax.numpy as jnp
from jax.experimental import pallas as pl
from jax.experimental.pallas import tpu as pltpu


def _round_up(x, m):
    return ((x + m - 1) // m) * m


def _effdwsep_kernel(x_ref, rc_ref, dw_w_ref, dw_s_ref, dw_b_ref, dw_a_ref,
                     pj_wt_ref, pj_s_ref, pj_b_ref, pj_a_ref, lin_w_ref,
                     out_ref, pad_ref, *, H, W, ksize, pad):
    F = H * W
    pk = (ksize - 1) // 2

    row_ids = rc_ref[0:1, :]        # (1, F) int32: pixel // W
    col_ids = rc_ref[1:2, :]        # (1, F) int32: pixel %  W

    def tap(dy, dx):
        # Spatially shifted view of the staged (C, F) slab, zero outside the
        # image (masked read; the scratch halo is never written/zeroed).
        s = dy * W + dx
        slab = pad_ref[:, pad + s: pad + s + F]
        if dy == 0 and dx == 0:
            return slab
        ok = jnp.logical_and(
            jnp.logical_and(row_ids >= -dy, row_ids < H - dy),
            jnp.logical_and(col_ids >= -dx, col_ids < W - dx))
        return jnp.where(ok, slab, 0.0)

    # ---- stage input (lane-aligned interior write) ----
    pad_ref[:, pad: pad + F] = x_ref[...].astype(jnp.float32)

    # ---- depthwise k x k conv + folded BN + PReLU, vectorized over channels ----
    acc = jnp.zeros(x_ref.shape, jnp.float32)
    for ky in range(ksize):
        for kx in range(ksize):
            t = ky * ksize + kx
            w = dw_w_ref[:, t: t + 1]                     # (Cin, 1)
            acc = acc + tap(ky - pk, kx - pk) * w
    y = acc * dw_s_ref[...] + dw_b_ref[...]
    y = jnp.where(y >= 0.0, y, dw_a_ref[...] * y)

    # ---- gate: sigmoid(1x1 conv(global avg pool(y))) ----
    # lin_w @ mean(y) == row-mean of (lin_w @ y): one MXU matmul, one lane
    # reduction, Cout exps total.
    g = jnp.dot(lin_w_ref[...], y, preferred_element_type=jnp.float32)  # (Cout, F)
    z = jnp.sum(g, axis=1, keepdims=True) * (1.0 / F)                   # (Cout, 1)
    gate = 1.0 / (1.0 + jnp.exp(-z))

    # ---- grouped 3x3 projection conv on the MXU + folded BN + PReLU ----
    # 9 matmuls with group-expanded (block-sparse dense) weight taps.
    # (On v6e/v7x the operands could be cast to bf16 for 2x MXU throughput;
    #  kept f32 here for parity with the f32 reference.)
    pad_ref[:, pad: pad + F] = y
    proj = jnp.zeros(out_ref.shape, jnp.float32)
    for t in range(9):
        dy, dx = t // 3 - 1, t % 3 - 1
        proj = proj + jnp.dot(pj_wt_ref[t], tap(dy, dx),
                              preferred_element_type=jnp.float32)
    p = proj * pj_s_ref[...] + pj_b_ref[...]
    p = jnp.where(p >= 0.0, p, pj_a_ref[...] * p)

    out_ref[...] = (p * gate).astype(out_ref.dtype)


def eff_dw_sep_conv(x, params, *, channel_out, ksize, groups):
    B, Cin, H, W = x.shape
    Cout = channel_out
    F = H * W
    pk = (ksize - 1) // 2
    cin_g = Cin // groups
    cout_g = Cout // groups
    Cin_p = _round_up(Cin, 8)
    Cout_p = _round_up(Cout, 8)
    PAD = _round_up(max(pk * W + pk, W + 1), 128)

    f32 = jnp.float32

    # ---- repack / pad parameters (pure JAX, outside the kernel) ----
    def col(v, n):
        return jnp.zeros((n, 1), f32).at[:v.shape[0], 0].set(v.astype(f32))

    dw_w = jnp.zeros((Cin_p, ksize * ksize), f32).at[:Cin].set(
        params["dw_w"].astype(f32))
    dw_s = col(params["dw_scale"], Cin_p)
    dw_b = col(params["dw_shift"], Cin_p)
    dw_a = col(params["dw_alpha"], Cin_p)
    pj_s = col(params["pj_scale"], Cout_p)
    pj_b = col(params["pj_shift"], Cout_p)
    pj_a = col(params["pj_alpha"], Cout_p)
    lin_w = jnp.zeros((Cout_p, Cin_p), f32).at[:Cout, :Cin].set(
        params["lin_w"].astype(f32))

    # Group-expand the grouped 3x3 weights into 9 dense (Cout_p, Cin_p) tap
    # matrices (zeros outside each group), so the projection is plain matmuls.
    pj_w3 = params["pj_w"].astype(f32).reshape(Cout, cin_g, 9)
    pj_wt = jnp.zeros((9, Cout_p, Cin_p), f32)
    for co in range(Cout):
        gi = co // cout_g
        pj_wt = pj_wt.at[:, co, gi * cin_g:(gi + 1) * cin_g].set(pj_w3[co].T)

    # row / column index of every flattened pixel (for the halo masks).
    idx = jnp.arange(F, dtype=jnp.int32)
    rc = jnp.stack([idx // W, idx % W], axis=0)              # (2, F)

    # lane-dense input: (B, Cin_p, H*W)
    x2 = jnp.zeros((B, Cin_p, F), x.dtype).at[:, :Cin, :].set(
        x.reshape(B, Cin, F))

    kernel = functools.partial(_effdwsep_kernel, H=H, W=W, ksize=ksize,
                               pad=PAD)

    def full(shape):
        return pl.BlockSpec(shape, lambda b, _n=len(shape): (0,) * _n)

    grid_spec = pltpu.PrefetchScalarGridSpec(
        num_scalar_prefetch=0,
        grid=(B,),
        in_specs=[
            pl.BlockSpec((None, Cin_p, F), lambda b: (b, 0, 0)),
            full((2, F)),
            full((Cin_p, ksize * ksize)),
            full((Cin_p, 1)), full((Cin_p, 1)), full((Cin_p, 1)),
            full((9, Cout_p, Cin_p)),
            full((Cout_p, 1)), full((Cout_p, 1)), full((Cout_p, 1)),
            full((Cout_p, Cin_p)),
        ],
        out_specs=pl.BlockSpec((None, Cout_p, F), lambda b: (b, 0, 0)),
        scratch_shapes=[pltpu.VMEM((Cin_p, F + 2 * PAD), jnp.float32)],
    )
    out = pl.pallas_call(
        kernel,
        out_shape=jax.ShapeDtypeStruct((B, Cout_p, F), x.dtype),
        grid_spec=grid_spec,
        compiler_params=pltpu.CompilerParams(
            dimension_semantics=("parallel",)),
    )(x2, rc, dw_w, dw_s, dw_b, dw_a, pj_wt, pj_s, pj_b, pj_a, lin_w)

    return out[:, :Cout, :].reshape(B, Cout, H, W)


def reference(x, params, *, channel_out, ksize, groups):
    """Pure-JAX reference mirroring the kernel math (eval-mode BN)."""
    B, Cin, H, W = x.shape
    Cout = channel_out
    padk = (ksize - 1) // 2
    dw_w = params["dw_w"]
    xp = jnp.pad(x, ((0, 0), (0, 0), (padk, padk), (padk, padk)))
    acc = jnp.zeros((B, Cin, H, W), jnp.float32)
    for ky in range(ksize):
        for kx in range(ksize):
            acc = acc + xp[:, :, ky:ky + H, kx:kx + W] * \
                dw_w[:, ky * ksize + kx][None, :, None, None]
    y = acc * params["dw_scale"][None, :, None, None] + \
        params["dw_shift"][None, :, None, None]
    y = jnp.where(y >= 0, y, params["dw_alpha"][None, :, None, None] * y)

    yp = jnp.pad(y, ((0, 0), (0, 0), (1, 1), (1, 1)))
    cin_g, cout_g = Cin // groups, Cout // groups
    outs = []
    for co in range(Cout):
        gi = co // cout_g
        acc2 = jnp.zeros((B, H, W), jnp.float32)
        for ci in range(cin_g):
            c_in = gi * cin_g + ci
            for ky in range(3):
                for kx in range(3):
                    acc2 = acc2 + yp[:, c_in, ky:ky + H, kx:kx + W] * \
                        params["pj_w"][co, ci * 9 + ky * 3 + kx]
        p = acc2 * params["pj_scale"][co] + params["pj_shift"][co]
        p = jnp.where(p >= 0, p, params["pj_alpha"][co] * p)
        outs.append(p)
    proj = jnp.stack(outs, axis=1)

    m = jnp.mean(y, axis=(2, 3))                                   # (B, Cin)
    z = jnp.sum(m[:, None, :] * params["lin_w"][None, :, :], -1)   # (B, Cout)
    gate = jax.nn.sigmoid(z)[:, :, None, None]
    return proj * gate


def make_params(key, channel_in, channel_out, ksize):
    groups = math.gcd(channel_in, channel_out)
    ks = jax.random.split(key, 11)

    dw_w = 0.2 * jax.random.normal(ks[0], (channel_in, 1, ksize, ksize),
                                   jnp.float32)
    pj_w = 0.2 * jax.random.normal(ks[1], (channel_out, channel_in // groups,
                                           3, 3), jnp.float32)
    lin_w = 0.5 * jax.random.normal(ks[2], (channel_out, channel_in, 1, 1),
                                    jnp.float32)

    def bn_fold(kg, kb, km, kv, n):
        gamma = 1.0 + 0.1 * jax.random.normal(kg, (n,), jnp.float32)
        beta = 0.1 * jax.random.normal(kb, (n,), jnp.float32)
        mean = 0.1 * jax.random.normal(km, (n,), jnp.float32)
        var = jnp.abs(jax.random.normal(kv, (n,), jnp.float32)) + 0.5
        scale = gamma / jnp.sqrt(var + 1e-5)
        shift = beta - mean * scale
        return scale, shift

    dw_scale, dw_shift = bn_fold(ks[3], ks[4], ks[5], ks[6], channel_in)
    pj_scale, pj_shift = bn_fold(ks[7], ks[8], ks[9], ks[10], channel_out)

    params = dict(
        dw_w=dw_w.reshape(channel_in, ksize * ksize),
        dw_scale=dw_scale, dw_shift=dw_shift,
        dw_alpha=jnp.full((channel_in,), 0.25, jnp.float32),
        pj_w=pj_w.reshape(channel_out, (channel_in // groups) * 9),
        pj_scale=pj_scale, pj_shift=pj_shift,
        pj_alpha=jnp.full((channel_out,), 0.25, jnp.float32),
        lin_w=lin_w.reshape(channel_out, channel_in),
    )
    return params, groups


if __name__ == "__main__":
    B, Cin, Cout, H, W, KSIZE = 2, 4, 8, 16, 16, 3

    key = jax.random.PRNGKey(0)
    k_x, k_p = jax.random.split(key)
    x = jax.random.normal(k_x, (B, Cin, H, W), jnp.float32)
    params, groups = make_params(k_p, Cin, Cout, KSIZE)

    out = eff_dw_sep_conv(x, params, channel_out=Cout, ksize=KSIZE,
                          groups=groups)
    out = jax.block_until_ready(out)

    ref = reference(x, params, channel_out=Cout, ksize=KSIZE, groups=groups)
    assert out.shape == (B, Cout, H, W)
    err = jnp.max(jnp.abs(out - ref))
    # Tolerance allows for the MXU's internal bf16-pass f32 matmul modes.
    assert jnp.allclose(out, ref, atol=1e-2, rtol=1e-2), f"max err {err}"

    print("KERNEL_OK")
</pallas_src>

<mosaic_0001>
module attributes {stable_mosaic.version = 11 : i64} {
  func.func @_effdwsep_kernel(%arg0: i32, %arg1: memref<1x8x256xf32, #tpu.memory_space<vmem>>, %arg2: memref<2x256xi32, #tpu.memory_space<vmem>>, %arg3: memref<8x9xf32, #tpu.memory_space<vmem>>, %arg4: memref<8x1xf32, #tpu.memory_space<vmem>>, %arg5: memref<8x1xf32, #tpu.memory_space<vmem>>, %arg6: memref<8x1xf32, #tpu.memory_space<vmem>>, %arg7: memref<9x8x8xf32, #tpu.memory_space<vmem>>, %arg8: memref<8x1xf32, #tpu.memory_space<vmem>>, %arg9: memref<8x1xf32, #tpu.memory_space<vmem>>, %arg10: memref<8x1xf32, #tpu.memory_space<vmem>>, %arg11: memref<8x8xf32, #tpu.memory_space<vmem>>, %arg12: memref<1x8x256xf32, #tpu.memory_space<vmem>>, %arg13: memref<8x512xf32, #tpu.memory_space<vmem>>) attributes {dimension_semantics = [#tpu.dimension_semantics<parallel>], iteration_bounds = array<i64: 2>, scalar_prefetch = 0 : i64, scratch_operands = 1 : i64, tpu.core_type = #tpu.core_type<tc>, window_params = [{transform_indices = @transform_0, window_bounds = array<i64: 1, 8, 256>}, {pipeline_mode = #tpu.pipeline_mode<synchronous>, transform_indices = @transform_1, window_bounds = array<i64: 2, 256>}, {pipeline_mode = #tpu.pipeline_mode<synchronous>, transform_indices = @transform_2, window_bounds = array<i64: 8, 9>}, {pipeline_mode = #tpu.pipeline_mode<synchronous>, transform_indices = @transform_3, window_bounds = array<i64: 8, 1>}, {pipeline_mode = #tpu.pipeline_mode<synchronous>, transform_indices = @transform_4, window_bounds = array<i64: 8, 1>}, {pipeline_mode = #tpu.pipeline_mode<synchronous>, transform_indices = @transform_5, window_bounds = array<i64: 8, 1>}, {pipeline_mode = #tpu.pipeline_mode<synchronous>, transform_indices = @transform_6, window_bounds = array<i64: 9, 8, 8>}, {pipeline_mode = #tpu.pipeline_mode<synchronous>, transform_indices = @transform_7, window_bounds = array<i64: 8, 1>}, {pipeline_mode = #tpu.pipeline_mode<synchronous>, transform_indices = @transform_8, window_bounds = array<i64: 8, 1>}, {pipeline_mode = #tpu.pipeline_mode<synchronous>, transform_indices = @transform_9, window_bounds = array<i64: 8, 1>}, {pipeline_mode = #tpu.pipeline_mode<synchronous>, transform_indices = @transform_10, window_bounds = array<i64: 8, 8>}, {transform_indices = @transform_11, window_bounds = array<i64: 1, 8, 256>}]} {
    %c0 = arith.constant 0 : index
    %c0_0 = arith.constant 0 : index
    %0 = vector.load %arg2[%c0, %c0_0] : memref<2x256xi32, #tpu.memory_space<vmem>>, vector<1x256xi32>
    %c1 = arith.constant 1 : index
    %c0_1 = arith.constant 0 : index
    %1 = vector.load %arg2[%c1, %c0_1] : memref<2x256xi32, #tpu.memory_space<vmem>>, vector<1x256xi32>
    %c0_2 = arith.constant 0 : index
    %c0_3 = arith.constant 0 : index
    %c0_4 = arith.constant 0 : index
    %2 = vector.load %arg1[%c0_2, %c0_3, %c0_4] : memref<1x8x256xf32, #tpu.memory_space<vmem>>, vector<1x8x256xf32>
    %3 = vector.shape_cast %2 : vector<1x8x256xf32> to vector<8x256xf32>
    %c0_5 = arith.constant 0 : index
    %c128 = arith.constant 128 : index
    %4 = vector.load %arg13[%c0_5, %c128] : memref<8x512xf32, #tpu.memory_space<vmem>>, vector<8x256xf32>
    tpu.vector_store %arg13[%c0_5, %c128], %3 {strides = array<i32>} : memref<8x512xf32, #tpu.memory_space<vmem>>, vector<8x256xf32>,
    %cst = arith.constant 0.000000e+00 : f32
    %5 = vector.broadcast %cst : f32 to vector<8x256xf32>
    %c0_6 = arith.constant 0 : index
    %c0_7 = arith.constant 0 : index
    %6 = vector.load %arg3[%c0_6, %c0_7] : memref<8x9xf32, #tpu.memory_space<vmem>>, vector<8x1xf32>
    %c0_8 = arith.constant 0 : index
    %c111 = arith.constant 111 : index
    %7 = vector.load %arg13[%c0_8, %c111] : memref<8x512xf32, #tpu.memory_space<vmem>>, vector<8x256xf32>
    %c1_i32 = arith.constant 1 : i32
    %8 = vector.broadcast %c1_i32 : i32 to vector<1x256xi32>
    %9 = arith.cmpi sge, %0, %8 : vector<1x256xi32>
    %c17_i32 = arith.constant 17 : i32
    %10 = vector.broadcast %c17_i32 : i32 to vector<1x256xi32>
    %11 = arith.cmpi slt, %0, %10 : vector<1x256xi32>
    %12 = arith.andi %9, %11 : vector<1x256xi1>
    %c1_i32_9 = arith.constant 1 : i32
    %13 = vector.broadcast %c1_i32_9 : i32 to vector<1x256xi32>
    %14 = arith.cmpi sge, %1, %13 : vector<1x256xi32>
    %c17_i32_10 = arith.constant 17 : i32
    %15 = vector.broadcast %c17_i32_10 : i32 to vector<1x256xi32>
    %16 = arith.cmpi slt, %1, %15 : vector<1x256xi32>
    %17 = arith.andi %14, %16 : vector<1x256xi1>
    %18 = arith.andi %12, %17 : vector<1x256xi1>
    %cst_11 = arith.constant 0.000000e+00 : f32
    %19 = vector.shape_cast %18 : vector<1x256xi1> to vector<1x256xi1>
    %20 = vector.broadcast %19 : vector<1x256xi1> to vector<8x256xi1>
    %21 = vector.broadcast %cst_11 : f32 to vector<8x256xf32>
    %22 = arith.select %20, %7, %21 : vector<8x256xi1>, vector<8x256xf32>
    %23 = vector.broadcast %6 : vector<8x1xf32> to vector<8x256xf32>
    %24 = arith.mulf %22, %23 : vector<8x256xf32>
    %25 = arith.addf %5, %24 : vector<8x256xf32>
    %c0_12 = arith.constant 0 : index
    %c1_13 = arith.constant 1 : index
    %26 = vector.load %arg3[%c0_12, %c1_13] : memref<8x9xf32, #tpu.memory_space<vmem>>, vector<8x1xf32>
    %c0_14 = arith.constant 0 : index
    %c112 = arith.constant 112 : index
    %27 = vector.load %arg13[%c0_14, %c112] : memref<8x512xf32, #tpu.memory_space<vmem>>, vector<8x256xf32>
    %c1_i32_15 = arith.constant 1 : i32
    %28 = vector.broadcast %c1_i32_15 : i32 to vector<1x256xi32>
    %29 = arith.cmpi sge, %0, %28 : vector<1x256xi32>
    %c17_i32_16 = arith.constant 17 : i32
    %30 = vector.broadcast %c17_i32_16 : i32 to vector<1x256xi32>
    %31 = arith.cmpi slt, %0, %30 : vector<1x256xi32>
    %32 = arith.andi %29, %31 : vector<1x256xi1>
    %c0_i32 = arith.constant 0 : i32
    %33 = vector.broadcast %c0_i32 : i32 to vector<1x256xi32>
    %34 = arith.cmpi sge, %1, %33 : vector<1x256xi32>
    %c16_i32 = arith.constant 16 : i32
    %35 = vector.broadcast %c16_i32 : i32 to vector<1x256xi32>
    %36 = arith.cmpi slt, %1, %35 : vector<1x256xi32>
    %37 = arith.andi %34, %36 : vector<1x256xi1>
    %38 = arith.andi %32, %37 : vector<1x256xi1>
    %cst_17 = arith.constant 0.000000e+00 : f32
    %39 = vector.shape_cast %38 : vector<1x256xi1> to vector<1x256xi1>
    %40 = vector.broadcast %39 : vector<1x256xi1> to vector<8x256xi1>
    %41 = vector.broadcast %cst_17 : f32 to vector<8x256xf32>
    %42 = arith.select %40, %27, %41 : vector<8x256xi1>, vector<8x256xf32>
    %43 = vector.broadcast %26 : vector<8x1xf32> to vector<8x256xf32>
    %44 = arith.mulf %42, %43 : vector<8x256xf32>
    %45 = arith.addf %25, %44 : vector<8x256xf32>
    %c0_18 = arith.constant 0 : index
    %c2 = arith.constant 2 : index
    %46 = vector.load %arg3[%c0_18, %c2] : memref<8x9xf32, #tpu.memory_space<vmem>>, vector<8x1xf32>
    %c0_19 = arith.constant 0 : index
    %c113 = arith.constant 113 : index
    %47 = vector.load %arg13[%c0_19, %c113] : memref<8x512xf32, #tpu.memory_space<vmem>>, vector<8x256xf32>
    %c1_i32_20 = arith.constant 1 : i32
    %48 = vector.broadcast %c1_i32_20 : i32 to vector<1x256xi32>
    %49 = arith.cmpi sge, %0, %48 : vector<1x256xi32>
    %c17_i32_21 = arith.constant 17 : i32
    %50 = vector.broadcast %c17_i32_21 : i32 to vector<1x256xi32>
    %51 = arith.cmpi slt, %0, %50 : vector<1x256xi32>
    %52 = arith.andi %49, %51 : vector<1x256xi1>
    %c-1_i32 = arith.constant -1 : i32
    %53 = vector.broadcast %c-1_i32 : i32 to vector<1x256xi32>
    %54 = arith.cmpi sge, %1, %53 : vector<1x256xi32>
    %c15_i32 = arith.constant 15 : i32
    %55 = vector.broadcast %c15_i32 : i32 to vector<1x256xi32>
    %56 = arith.cmpi slt, %1, %55 : vector<1x256xi32>
    %57 = arith.andi %54, %56 : vector<1x256xi1>
    %58 = arith.andi %52, %57 : vector<1x256xi1>
    %cst_22 = arith.constant 0.000000e+00 : f32
    %59 = vector.shape_cast %58 : vector<1x256xi1> to vector<1x256xi1>
    %60 = vector.broadcast %59 : vector<1x256xi1> to vector<8x256xi1>
    %61 = vector.broadcast %cst_22 : f32 to vector<8x256xf32>
    %62 = arith.select %60, %47, %61 : vector<8x256xi1>, vector<8x256xf32>
    %63 = vector.broadcast %46 : vector<8x1xf32> to vector<8x256xf32>
    %64 = arith.mulf %62, %63 : vector<8x256xf32>
    %65 = arith.addf %45, %64 : vector<8x256xf32>
    %c0_23 = arith.constant 0 : index
    %c3 = arith.constant 3 : index
    %66 = vector.load %arg3[%c0_23, %c3] : memref<8x9xf32, #tpu.memory_space<vmem>>, vector<8x1xf32>
    %c0_24 = arith.constant 0 : index
    %c127 = arith.constant 127 : index
    %67 = vector.load %arg13[%c0_24, %c127] : memref<8x512xf32, #tpu.memory_space<vmem>>, vector<8x256xf32>
    %c0_i32_25 = arith.constant 0 : i32
    %68 = vector.broadcast %c0_i32_25 : i32 to vector<1x256xi32>
    %69 = arith.cmpi sge, %0, %68 : vector<1x256xi32>
    %c16_i32_26 = arith.constant 16 : i32
    %70 = vector.broadcast %c16_i32_26 : i32 to vector<1x256xi32>
    %71 = arith.cmpi slt, %0, %70 : vector<1x256xi32>
    %72 = arith.andi %69, %71 : vector<1x256xi1>
    %c1_i32_27 = arith.constant 1 : i32
    %73 = vector.broadcast %c1_i32_27 : i32 to vector<1x256xi32>
    %74 = arith.cmpi sge, %1, %73 : vector<1x256xi32>
    %c17_i32_28 = arith.constant 17 : i32
    %75 = vector.broadcast %c17_i32_28 : i32 to vector<1x256xi32>
    %76 = arith.cmpi slt, %1, %75 : vector<1x256xi32>
    %77 = arith.andi %74, %76 : vector<1x256xi1>
    %78 = arith.andi %72, %77 : vector<1x256xi1>
    %cst_29 = arith.constant 0.000000e+00 : f32
    %79 = vector.shape_cast %78 : vector<1x256xi1> to vector<1x256xi1>
    %80 = vector.broadcast %79 : vector<1x256xi1> to vector<8x256xi1>
    %81 = vector.broadcast %cst_29 : f32 to vector<8x256xf32>
    %82 = arith.select %80, %67, %81 : vector<8x256xi1>, vector<8x256xf32>
    %83 = vector.broadcast %66 : vector<8x1xf32> to vector<8x256xf32>
    %84 = arith.mulf %82, %83 : vector<8x256xf32>
    %85 = arith.addf %65, %84 : vector<8x256xf32>
    %c0_30 = arith.constant 0 : index
    %c4 = arith.constant 4 : index
    %86 = vector.load %arg3[%c0_30, %c4] : memref<8x9xf32, #tpu.memory_space<vmem>>, vector<8x1xf32>
    %c0_31 = arith.constant 0 : index
    %c128_32 = arith.constant 128 : index
    %87 = vector.load %arg13[%c0_31, %c128_32] : memref<8x512xf32, #tpu.memory_space<vmem>>, vector<8x256xf32>
    %88 = vector.broadcast %86 : vector<8x1xf32> to vector<8x256xf32>
    %89 = arith.mulf %87, %88 : vector<8x256xf32>
    %90 = arith.addf %85, %89 : vector<8x256xf32>
    %c0_33 = arith.constant 0 : index
    %c5 = arith.constant 5 : index
    %91 = vector.load %arg3[%c0_33, %c5] : memref<8x9xf32, #tpu.memory_space<vmem>>, vector<8x1xf32>
    %c0_34 = arith.constant 0 : index
    %c129 = arith.constant 129 : index
    %92 = vector.load %arg13[%c0_34, %c129] : memref<8x512xf32, #tpu.memory_space<vmem>>, vector<8x256xf32>
    %c0_i32_35 = arith.constant 0 : i32
    %93 = vector.broadcast %c0_i32_35 : i32 to vector<1x256xi32>
    %94 = arith.cmpi sge, %0, %93 : vector<1x256xi32>
    %c16_i32_36 = arith.constant 16 : i32
    %95 = vector.broadcast %c16_i32_36 : i32 to vector<1x256xi32>
    %96 = arith.cmpi slt, %0, %95 : vector<1x256xi32>
    %97 = arith.andi %94, %96 : vector<1x256xi1>
    %c-1_i32_37 = arith.constant -1 : i32
    %98 = vector.broadcast %c-1_i32_37 : i32 to vector<1x256xi32>
    %99 = arith.cmpi sge, %1, %98 : vector<1x256xi32>
    %c15_i32_38 = arith.constant 15 : i32
    %100 = vector.broadcast %c15_i32_38 : i32 to vector<1x256xi32>
    %101 = arith.cmpi slt, %1, %100 : vector<1x256xi32>
    %102 = arith.andi %99, %101 : vector<1x256xi1>
    %103 = arith.andi %97, %102 : vector<1x256xi1>
    %cst_39 = arith.constant 0.000000e+00 : f32
    %104 = vector.shape_cast %103 : vector<1x256xi1> to vector<1x256xi1>
    %105 = vector.broadcast %104 : vector<1x256xi1> to vector<8x256xi1>
    %106 = vector.broadcast %cst_39 : f32 to vector<8x256xf32>
    %107 = arith.select %105, %92, %106 : vector<8x256xi1>, vector<8x256xf32>
    %108 = vector.broadcast %91 : vector<8x1xf32> to vector<8x256xf32>
    %109 = arith.mulf %107, %108 : vector<8x256xf32>
    %110 = arith.addf %90, %109 : vector<8x256xf32>
    %c0_40 = arith.constant 0 : index
    %c6 = arith.constant 6 : index
    %111 = vector.load %arg3[%c0_40, %c6] : memref<8x9xf32, #tpu.memory_space<vmem>>, vector<8x1xf32>
    %c0_41 = arith.constant 0 : index
    %c143 = arith.constant 143 : index
    %112 = vector.load %arg13[%c0_41, %c143] : memref<8x512xf32, #tpu.memory_space<vmem>>, vector<8x256xf32>
    %c-1_i32_42 = arith.constant -1 : i32
    %113 = vector.broadcast %c-1_i32_42 : i32 to vector<1x256xi32>
    %114 = arith.cmpi sge, %0, %113 : vector<1x256xi32>
    %c15_i32_43 = arith.constant 15 : i32
    %115 = vector.broadcast %c15_i32_43 : i32 to vector<1x256xi32>
    %116 = arith.cmpi slt, %0, %115 : vector<1x256xi32>
    %117 = arith.andi %114, %116 : vector<1x256xi1>
    %c1_i32_44 = arith.constant 1 : i32
    %118 = vector.broadcast %c1_i32_44 : i32 to vector<1x256xi32>
    %119 = arith.cmpi sge, %1, %118 : vector<1x256xi32>
    %c17_i32_45 = arith.constant 17 : i32
    %120 = vector.broadcast %c17_i32_45 : i32 to vector<1x256xi32>
    %121 = arith.cmpi slt, %1, %120 : vector<1x256xi32>
    %122 = arith.andi %119, %121 : vector<1x256xi1>
    %123 = arith.andi %117, %122 : vector<1x256xi1>
    %cst_46 = arith.constant 0.000000e+00 : f32
    %124 = vector.shape_cast %123 : vector<1x256xi1> to vector<1x256xi1>
    %125 = vector.broadcast %124 : vector<1x256xi1> to vector<8x256xi1>
    %126 = vector.broadcast %cst_46 : f32 to vector<8x256xf32>
    %127 = arith.select %125, %112, %126 : vector<8x256xi1>, vector<8x256xf32>
    %128 = vector.broadcast %111 : vector<8x1xf32> to vector<8x256xf32>
    %129 = arith.mulf %127, %128 : vector<8x256xf32>
    %130 = arith.addf %110, %129 : vector<8x256xf32>
    %c0_47 = arith.constant 0 : index
    %c7 = arith.constant 7 : index
    %131 = vector.load %arg3[%c0_47, %c7] : memref<8x9xf32, #tpu.memory_space<vmem>>, vector<8x1xf32>
    %c0_48 = arith.constant 0 : index
    %c144 = arith.constant 144 : index
    %132 = vector.load %arg13[%c0_48, %c144] : memref<8x512xf32, #tpu.memory_space<vmem>>, vector<8x256xf32>
    %c-1_i32_49 = arith.constant -1 : i32
    %133 = vector.broadcast %c-1_i32_49 : i32 to vector<1x256xi32>
    %134 = arith.cmpi sge, %0, %133 : vector<1x256xi32>
    %c15_i32_50 = arith.constant 15 : i32
    %135 = vector.broadcast %c15_i32_50 : i32 to vector<1x256xi32>
    %136 = arith.cmpi slt, %0, %135 : vector<1x256xi32>
    %137 = arith.andi %134, %136 : vector<1x256xi1>
    %c0_i32_51 = arith.constant 0 : i32
    %138 = vector.broadcast %c0_i32_51 : i32 to vector<1x256xi32>
    %139 = arith.cmpi sge, %1, %138 : vector<1x256xi32>
    %c16_i32_52 = arith.constant 16 : i32
    %140 = vector.broadcast %c16_i32_52 : i32 to vector<1x256xi32>
    %141 = arith.cmpi slt, %1, %140 : vector<1x256xi32>
    %142 = arith.andi %139, %141 : vector<1x256xi1>
    %143 = arith.andi %137, %142 : vector<1x256xi1>
    %cst_53 = arith.constant 0.000000e+00 : f32
    %144 = vector.shape_cast %143 : vector<1x256xi1> to vector<1x256xi1>
    %145 = vector.broadcast %144 : vector<1x256xi1> to vector<8x256xi1>
    %146 = vector.broadcast %cst_53 : f32 to vector<8x256xf32>
    %147 = arith.select %145, %132, %146 : vector<8x256xi1>, vector<8x256xf32>
    %148 = vector.broadcast %131 : vector<8x1xf32> to vector<8x256xf32>
    %149 = arith.mulf %147, %148 : vector<8x256xf32>
    %150 = arith.addf %130, %149 : vector<8x256xf32>
    %c0_54 = arith.constant 0 : index
    %c8 = arith.constant 8 : index
    %151 = vector.load %arg3[%c0_54, %c8] : memref<8x9xf32, #tpu.memory_space<vmem>>, vector<8x1xf32>
    %c0_55 = arith.constant 0 : index
    %c145 = arith.constant 145 : index
    %152 = vector.load %arg13[%c0_55, %c145] : memref<8x512xf32, #tpu.memory_space<vmem>>, vector<8x256xf32>
    %c-1_i32_56 = arith.constant -1 : i32
    %153 = vector.broadcast %c-1_i32_56 : i32 to vector<1x256xi32>
    %154 = arith.cmpi sge, %0, %153 : vector<1x256xi32>
    %c15_i32_57 = arith.constant 15 : i32
    %155 = vector.broadcast %c15_i32_57 : i32 to vector<1x256xi32>
    %156 = arith.cmpi slt, %0, %155 : vector<1x256xi32>
    %157 = arith.andi %154, %156 : vector<1x256xi1>
    %c-1_i32_58 = arith.constant -1 : i32
    %158 = vector.broadcast %c-1_i32_58 : i32 to vector<1x256xi32>
    %159 = arith.cmpi sge, %1, %158 : vector<1x256xi32>
    %c15_i32_59 = arith.constant 15 : i32
    %160 = vector.broadcast %c15_i32_59 : i32 to vector<1x256xi32>
    %161 = arith.cmpi slt, %1, %160 : vector<1x256xi32>
    %162 = arith.andi %159, %161 : vector<1x256xi1>
    %163 = arith.andi %157, %162 : vector<1x256xi1>
    %cst_60 = arith.constant 0.000000e+00 : f32
    %164 = vector.shape_cast %163 : vector<1x256xi1> to vector<1x256xi1>
    %165 = vector.broadcast %164 : vector<1x256xi1> to vector<8x256xi1>
    %166 = vector.broadcast %cst_60 : f32 to vector<8x256xf32>
    %167 = arith.select %165, %152, %166 : vector<8x256xi1>, vector<8x256xf32>
    %168 = vector.broadcast %151 : vector<8x1xf32> to vector<8x256xf32>
    %169 = arith.mulf %167, %168 : vector<8x256xf32>
    %170 = arith.addf %150, %169 : vector<8x256xf32>
    %c0_61 = arith.constant 0 : index
    %c0_62 = arith.constant 0 : index
    %171 = vector.load %arg4[%c0_61, %c0_62] : memref<8x1xf32, #tpu.memory_space<vmem>>, vector<8x1xf32>
    %172 = vector.broadcast %171 : vector<8x1xf32> to vector<8x256xf32>
    %173 = arith.mulf %170, %172 : vector<8x256xf32>
    %c0_63 = arith.constant 0 : index
    %c0_64 = arith.constant 0 : index
    %174 = vector.load %arg5[%c0_63, %c0_64] : memref<8x1xf32, #tpu.memory_space<vmem>>, vector<8x1xf32>
    %175 = vector.broadcast %174 : vector<8x1xf32> to vector<8x256xf32>
    %176 = arith.addf %173, %175 : vector<8x256xf32>
    %cst_65 = arith.constant 0.000000e+00 : f32
    %177 = vector.broadcast %cst_65 : f32 to vector<8x256xf32>
    %178 = arith.cmpf oge, %176, %177 : vector<8x256xf32>
    %c0_66 = arith.constant 0 : index
    %c0_67 = arith.constant 0 : index
    %179 = vector.load %arg6[%c0_66, %c0_67] : memref<8x1xf32, #tpu.memory_space<vmem>>, vector<8x1xf32>
    %180 = vector.broadcast %179 : vector<8x1xf32> to vector<8x256xf32>
    %181 = arith.mulf %180, %176 : vector<8x256xf32>
    %182 = arith.select %178, %176, %181 : vector<8x256xi1>, vector<8x256xf32>
    %c0_68 = arith.constant 0 : index
    %c0_69 = arith.constant 0 : index
    %183 = vector.load %arg11[%c0_68, %c0_69] : memref<8x8xf32, #tpu.memory_space<vmem>>, vector<8x8xf32>
    %cst_70 = arith.constant dense<0.000000e+00> : vector<8x256xf32>
    %184 = tpu.matmul %183, %182, %cst_70 {dimension_numbers = #tpu.dot_dimension_numbers<[1], [0], [0], [1], [0, 0, 1, 1], [], []>} : vector<8x8xf32>, vector<8x256xf32>, vector<8x256xf32> -> vector<8x256xf32>
    %cst_71 = arith.constant dense<0.000000e+00> : vector<8xf32>
    %185 = vector.multi_reduction <add>, %184, %cst_71 [1] : vector<8x256xf32> to vector<8xf32>
    %186 = vector.shape_cast %185 : vector<8xf32> to vector<8x1xf32>
    %cst_72 = arith.constant 3.906250e-03 : f32
    %187 = vector.broadcast %cst_72 : f32 to vector<8x1xf32>
    %188 = arith.mulf %186, %187 : vector<8x1xf32>
    %cst_73 = arith.constant 0.000000e+00 : f32
    %189 = vector.broadcast %cst_73 : f32 to vector<8x1xf32>
    %190 = arith.subf %189, %188 : vector<8x1xf32>
    %191 = math.exp %190 : vector<8x1xf32>
    %cst_74 = arith.constant 1.000000e+00 : f32
    %192 = vector.broadcast %cst_74 : f32 to vector<8x1xf32>
    %193 = arith.addf %192, %191 : vector<8x1xf32>
    %cst_75 = arith.constant 1.000000e+00 : f32
    %194 = vector.broadcast %cst_75 : f32 to vector<8x1xf32>
    %195 = arith.divf %194, %193 : vector<8x1xf32>
    %c0_76 = arith.constant 0 : index
    %c128_77 = arith.constant 128 : index
    %196 = vector.load %arg13[%c0_76, %c128_77] : memref<8x512xf32, #tpu.memory_space<vmem>>, vector<8x256xf32>
    tpu.vector_store %arg13[%c0_76, %c128_77], %182 {strides = array<i32>} : memref<8x512xf32, #tpu.memory_space<vmem>>, vector<8x256xf32>,
    %cst_78 = arith.constant 0.000000e+00 : f32
    %197 = vector.broadcast %cst_78 : f32 to vector<8x256xf32>
    %c0_79 = arith.constant 0 : index
    %c0_80 = arith.constant 0 : index
    %c0_81 = arith.constant 0 : index
    %198 = vector.load %arg7[%c0_79, %c0_80, %c0_81] : memref<9x8x8xf32, #tpu.memory_space<vmem>>, vector<1x8x8xf32>
    %199 = vector.shape_cast %198 : vector<1x8x8xf32> to vector<8x8xf32>
    %c0_82 = arith.constant 0 : index
    %c111_83 = arith.constant 111 : index
    %200 = vector.load %arg13[%c0_82, %c111_83] : memref<8x512xf32, #tpu.memory_space<vmem>>, vector<8x256xf32>
    %c1_i32_84 = arith.constant 1 : i32
    %201 = vector.broadcast %c1_i32_84 : i32 to vector<1x256xi32>
    %202 = arith.cmpi sge, %0, %201 : vector<1x256xi32>
    %c17_i32_85 = arith.constant 17 : i32
    %203 = vector.broadcast %c17_i32_85 : i32 to vector<1x256xi32>
    %204 = arith.cmpi slt, %0, %203 : vector<1x256xi32>
    %205 = arith.andi %202, %204 : vector<1x256xi1>
    %c1_i32_86 = arith.constant 1 : i32
    %206 = vector.broadcast %c1_i32_86 : i32 to vector<1x256xi32>
    %207 = arith.cmpi sge, %1, %206 : vector<1x256xi32>
    %c17_i32_87 = arith.constant 17 : i32
    %208 = vector.broadcast %c17_i32_87 : i32 to vector<1x256xi32>
    %209 = arith.cmpi slt, %1, %208 : vector<1x256xi32>
    %210 = arith.andi %207, %209 : vector<1x256xi1>
    %211 = arith.andi %205, %210 : vector<1x256xi1>
    %cst_88 = arith.constant 0.000000e+00 : f32
    %212 = vector.shape_cast %211 : vector<1x256xi1> to vector<1x256xi1>
    %213 = vector.broadcast %212 : vector<1x256xi1> to vector<8x256xi1>
    %214 = vector.broadcast %cst_88 : f32 to vector<8x256xf32>
    %215 = arith.select %213, %200, %214 : vector<8x256xi1>, vector<8x256xf32>
    %cst_89 = arith.constant dense<0.000000e+00> : vector<8x256xf32>
    %216 = tpu.matmul %199, %215, %cst_89 {dimension_numbers = #tpu.dot_dimension_numbers<[1], [0], [0], [1], [0, 0, 1, 1], [], []>} : vector<8x8xf32>, vector<8x256xf32>, vector<8x256xf32> -> vector<8x256xf32>
    %217 = arith.addf %197, %216 : vector<8x256xf32>
    %c1_90 = arith.constant 1 : index
    %c0_91 = arith.constant 0 : index
    %c0_92 = arith.constant 0 : index
    %218 = vector.load %arg7[%c1_90, %c0_91, %c0_92] : memref<9x8x8xf32, #tpu.memory_space<vmem>>, vector<1x8x8xf32>
    %219 = vector.shape_cast %218 : vector<1x8x8xf32> to vector<8x8xf32>
    %c0_93 = arith.constant 0 : index
    %c112_94 = arith.constant 112 : index
    %220 = vector.load %arg13[%c0_93, %c112_94] : memref<8x512xf32, #tpu.memory_space<vmem>>, vector<8x256xf32>
    %c1_i32_95 = arith.constant 1 : i32
    %221 = vector.broadcast %c1_i32_95 : i32 to vector<1x256xi32>
    %222 = arith.cmpi sge, %0, %221 : vector<1x256xi32>
    %c17_i32_96 = arith.constant 17 : i32
    %223 = vector.broadcast %c17_i32_96 : i32 to vector<1x256xi32>
    %224 = arith.cmpi slt, %0, %223 : vector<1x256xi32>
    %225 = arith.andi %222, %224 : vector<1x256xi1>
    %c0_i32_97 = arith.constant 0 : i32
    %226 = vector.broadcast %c0_i32_97 : i32 to vector<1x256xi32>
    %227 = arith.cmpi sge, %1, %226 : vector<1x256xi32>
    %c16_i32_98 = arith.constant 16 : i32
    %228 = vector.broadcast %c16_i32_98 : i32 to vector<1x256xi32>
    %229 = arith.cmpi slt, %1, %228 : vector<1x256xi32>
    %230 = arith.andi %227, %229 : vector<1x256xi1>
    %231 = arith.andi %225, %230 : vector<1x256xi1>
    %cst_99 = arith.constant 0.000000e+00 : f32
    %232 = vector.shape_cast %231 : vector<1x256xi1> to vector<1x256xi1>
    %233 = vector.broadcast %232 : vector<1x256xi1> to vector<8x256xi1>
    %234 = vector.broadcast %cst_99 : f32 to vector<8x256xf32>
    %235 = arith.select %233, %220, %234 : vector<8x256xi1>, vector<8x256xf32>
    %cst_100 = arith.constant dense<0.000000e+00> : vector<8x256xf32>
    %236 = tpu.matmul %219, %235, %cst_100 {dimension_numbers = #tpu.dot_dimension_numbers<[1], [0], [0], [1], [0, 0, 1, 1], [], []>} : vector<8x8xf32>, vector<8x256xf32>, vector<8x256xf32> -> vector<8x256xf32>
    %237 = arith.addf %217, %236 : vector<8x256xf32>
    %c2_101 = arith.constant 2 : index
    %c0_102 = arith.constant 0 : index
    %c0_103 = arith.constant 0 : index
    %238 = vector.load %arg7[%c2_101, %c0_102, %c0_103] : memref<9x8x8xf32, #tpu.memory_space<vmem>>, vector<1x8x8xf32>
    %239 = vector.shape_cast %238 : vector<1x8x8xf32> to vector<8x8xf32>
    %c0_104 = arith.constant 0 : index
    %c113_105 = arith.constant 113 : index
    %240 = vector.load %arg13[%c0_104, %c113_105] : memref<8x512xf32, #tpu.memory_space<vmem>>, vector<8x256xf32>
    %c1_i32_106 = arith.constant 1 : i32
    %241 = vector.broadcast %c1_i32_106 : i32 to vector<1x256xi32>
    %242 = arith.cmpi sge, %0, %241 : vector<1x256xi32>
    %c17_i32_107 = arith.constant 17 : i32
    %243 = vector.broadcast %c17_i32_107 : i32 to vector<1x256xi32>
    %244 = arith.cmpi slt, %0, %243 : vector<1x256xi32>
    %245 = arith.andi %242, %244 : vector<1x256xi1>
    %c-1_i32_108 = arith.constant -1 : i32
    %246 = vector.broadcast %c-1_i32_108 : i32 to vector<1x256xi32>
    %247 = arith.cmpi sge, %1, %246 : vector<1x256xi32>
    %c15_i32_109 = arith.constant 15 : i32
    %248 = vector.broadcast %c15_i32_109 : i32 to vector<1x256xi32>
    %249 = arith.cmpi slt, %1, %248 : vector<1x256xi32>
    %250 = arith.andi %247, %249 : vector<1x256xi1>
    %251 = arith.andi %245, %250 : vector<1x256xi1>
    %cst_110 = arith.constant 0.000000e+00 : f32
    %252 = vector.shape_cast %251 : vector<1x256xi1> to vector<1x256xi1>
    %253 = vector.broadcast %252 : vector<1x256xi1> to vector<8x256xi1>
    %254 = vector.broadcast %cst_110 : f32 to vector<8x256xf32>
    %255 = arith.select %253, %240, %254 : vector<8x256xi1>, vector<8x256xf32>
    %cst_111 = arith.constant dense<0.000000e+00> : vector<8x256xf32>
    %256 = tpu.matmul %239, %255, %cst_111 {dimension_numbers = #tpu.dot_dimension_numbers<[1], [0], [0], [1], [0, 0, 1, 1], [], []>} : vector<8x8xf32>, vector<8x256xf32>, vector<8x256xf32> -> vector<8x256xf32>
    %257 = arith.addf %237, %256 : vector<8x256xf32>
    %c3_112 = arith.constant 3 : index
    %c0_113 = arith.constant 0 : index
    %c0_114 = arith.constant 0 : index
    %258 = vector.load %arg7[%c3_112, %c0_113, %c0_114] : memref<9x8x8xf32, #tpu.memory_space<vmem>>, vector<1x8x8xf32>
    %259 = vector.shape_cast %258 : vector<1x8x8xf32> to vector<8x8xf32>
    %c0_115 = arith.constant 0 : index
    %c127_116 = arith.constant 127 : index
    %260 = vector.load %arg13[%c0_115, %c127_116] : memref<8x512xf32, #tpu.memory_space<vmem>>, vector<8x256xf32>
    %c0_i32_117 = arith.constant 0 : i32
    %261 = vector.broadcast %c0_i32_117 : i32 to vector<1x256xi32>
    %262 = arith.cmpi sge, %0, %261 : vector<1x256xi32>
    %c16_i32_118 = arith.constant 16 : i32
    %263 = vector.broadcast %c16_i32_118 : i32 to vector<1x256xi32>
    %264 = arith.cmpi slt, %0, %263 : vector<1x256xi32>
    %265 = arith.andi %262, %264 : vector<1x256xi1>
    %c1_i32_119 = arith.constant 1 : i32
    %266 = vector.broadcast %c1_i32_119 : i32 to vector<1x256xi32>
    %267 = arith.cmpi sge, %1, %266 : vector<1x256xi32>
    %c17_i32_120 = arith.constant 17 : i32
    %268 = vector.broadcast %c17_i32_120 : i32 to vector<1x256xi32>
    %269 = arith.cmpi slt, %1, %268 : vector<1x256xi32>
    %270 = arith.andi %267, %269 : vector<1x256xi1>
    %271 = arith.andi %265, %270 : vector<1x256xi1>
    %cst_121 = arith.constant 0.000000e+00 : f32
    %272 = vector.shape_cast %271 : vector<1x256xi1> to vector<1x256xi1>
    %273 = vector.broadcast %272 : vector<1x256xi1> to vector<8x256xi1>
    %274 = vector.broadcast %cst_121 : f32 to vector<8x256xf32>
    %275 = arith.select %273, %260, %274 : vector<8x256xi1>, vector<8x256xf32>
    %cst_122 = arith.constant dense<0.000000e+00> : vector<8x256xf32>
    %276 = tpu.matmul %259, %275, %cst_122 {dimension_numbers = #tpu.dot_dimension_numbers<[1], [0], [0], [1], [0, 0, 1, 1], [], []>} : vector<8x8xf32>, vector<8x256xf32>, vector<8x256xf32> -> vector<8x256xf32>
    %277 = arith.addf %257, %276 : vector<8x256xf32>
    %c4_123 = arith.constant 4 : index
    %c0_124 = arith.constant 0 : index
    %c0_125 = arith.constant 0 : index
    %278 = vector.load %arg7[%c4_123, %c0_124, %c0_125] : memref<9x8x8xf32, #tpu.memory_space<vmem>>, vector<1x8x8xf32>
    %279 = vector.shape_cast %278 : vector<1x8x8xf32> to vector<8x8xf32>
    %c0_126 = arith.constant 0 : index
    %c128_127 = arith.constant 128 : index
    %280 = vector.load %arg13[%c0_126, %c128_127] : memref<8x512xf32, #tpu.memory_space<vmem>>, vector<8x256xf32>
    %cst_128 = arith.constant dense<0.000000e+00> : vector<8x256xf32>
    %281 = tpu.matmul %279, %280, %cst_128 {dimension_numbers = #tpu.dot_dimension_numbers<[1], [0], [0], [1], [0, 0, 1, 1], [], []>} : vector<8x8xf32>, vector<8x256xf32>, vector<8x256xf32> -> vector<8x256xf32>
    %282 = arith.addf %277, %281 : vector<8x256xf32>
    %c5_129 = arith.constant 5 : index
    %c0_130 = arith.constant 0 : index
    %c0_131 = arith.constant 0 : index
    %283 = vector.load %arg7[%c5_129, %c0_130, %c0_131] : memref<9x8x8xf32, #tpu.memory_space<vmem>>, vector<1x8x8xf32>
    %284 = vector.shape_cast %283 : vector<1x8x8xf32> to vector<8x8xf32>
    %c0_132 = arith.constant 0 : index
    %c129_133 = arith.constant 129 : index
    %285 = vector.load %arg13[%c0_132, %c129_133] : memref<8x512xf32, #tpu.memory_space<vmem>>, vector<8x256xf32>
    %c0_i32_134 = arith.constant 0 : i32
    %286 = vector.broadcast %c0_i32_134 : i32 to vector<1x256xi32>
    %287 = arith.cmpi sge, %0, %286 : vector<1x256xi32>
    %c16_i32_135 = arith.constant 16 : i32
    %288 = vector.broadcast %c16_i32_135 : i32 to vector<1x256xi32>
    %289 = arith.cmpi slt, %0, %288 : vector<1x256xi32>
    %290 = arith.andi %287, %289 : vector<1x256xi1>
    %c-1_i32_136 = arith.constant -1 : i32
    %291 = vector.broadcast %c-1_i32_136 : i32 to vector<1x256xi32>
    %292 = arith.cmpi sge, %1, %291 : vector<1x256xi32>
    %c15_i32_137 = arith.constant 15 : i32
    %293 = vector.broadcast %c15_i32_137 : i32 to vector<1x256xi32>
    %294 = arith.cmpi slt, %1, %293 : vector<1x256xi32>
    %295 = arith.andi %292, %294 : vector<1x256xi1>
    %296 = arith.andi %290, %295 : vector<1x256xi1>
    %cst_138 = arith.constant 0.000000e+00 : f32
    %297 = vector.shape_cast %296 : vector<1x256xi1> to vector<1x256xi1>
    %298 = vector.broadcast %297 : vector<1x256xi1> to vector<8x256xi1>
    %299 = vector.broadcast %cst_138 : f32 to vector<8x256xf32>
    %300 = arith.select %298, %285, %299 : vector<8x256xi1>, vector<8x256xf32>
    %cst_139 = arith.constant dense<0.000000e+00> : vector<8x256xf32>
    %301 = tpu.matmul %284, %300, %cst_139 {dimension_numbers = #tpu.dot_dimension_numbers<[1], [0], [0], [1], [0, 0, 1, 1], [], []>} : vector<8x8xf32>, vector<8x256xf32>, vector<8x256xf32> -> vector<8x256xf32>
    %302 = arith.addf %282, %301 : vector<8x256xf32>
    %c6_140 = arith.constant 6 : index
    %c0_141 = arith.constant 0 : index
    %c0_142 = arith.constant 0 : index
    %303 = vector.load %arg7[%c6_140, %c0_141, %c0_142] : memref<9x8x8xf32, #tpu.memory_space<vmem>>, vector<1x8x8xf32>
    %304 = vector.shape_cast %303 : vector<1x8x8xf32> to vector<8x8xf32>
    %c0_143 = arith.constant 0 : index
    %c143_144 = arith.constant 143 : index
    %305 = vector.load %arg13[%c0_143, %c143_144] : memref<8x512xf32, #tpu.memory_space<vmem>>, vector<8x256xf32>
    %c-1_i32_145 = arith.constant -1 : i32
    %306 = vector.broadcast %c-1_i32_145 : i32 to vector<1x256xi32>
    %307 = arith.cmpi sge, %0, %306 : vector<1x256xi32>
    %c15_i32_146 = arith.constant 15 : i32
    %308 = vector.broadcast %c15_i32_146 : i32 to vector<1x256xi32>
    %309 = arith.cmpi slt, %0, %308 : vector<1x256xi32>
    %310 = arith.andi %307, %309 : vector<1x256xi1>
    %c1_i32_147 = arith.constant 1 : i32
    %311 = vector.broadcast %c1_i32_147 : i32 to vector<1x256xi32>
    %312 = arith.cmpi sge, %1, %311 : vector<1x256xi32>
    %c17_i32_148 = arith.constant 17 : i32
    %313 = vector.broadcast %c17_i32_148 : i32 to vector<1x256xi32>
    %314 = arith.cmpi slt, %1, %313 : vector<1x256xi32>
    %315 = arith.andi %312, %314 : vector<1x256xi1>
    %316 = arith.andi %310, %315 : vector<1x256xi1>
    %cst_149 = arith.constant 0.000000e+00 : f32
    %317 = vector.shape_cast %316 : vector<1x256xi1> to vector<1x256xi1>
    %318 = vector.broadcast %317 : vector<1x256xi1> to vector<8x256xi1>
    %319 = vector.broadcast %cst_149 : f32 to vector<8x256xf32>
    %320 = arith.select %318, %305, %319 : vector<8x256xi1>, vector<8x256xf32>
    %cst_150 = arith.constant dense<0.000000e+00> : vector<8x256xf32>
    %321 = tpu.matmul %304, %320, %cst_150 {dimension_numbers = #tpu.dot_dimension_numbers<[1], [0], [0], [1], [0, 0, 1, 1], [], []>} : vector<8x8xf32>, vector<8x256xf32>, vector<8x256xf32> -> vector<8x256xf32>
    %322 = arith.addf %302, %321 : vector<8x256xf32>
    %c7_151 = arith.constant 7 : index
    %c0_152 = arith.constant 0 : index
    %c0_153 = arith.constant 0 : index
    %323 = vector.load %arg7[%c7_151, %c0_152, %c0_153] : memref<9x8x8xf32, #tpu.memory_space<vmem>>, vector<1x8x8xf32>
    %324 = vector.shape_cast %323 : vector<1x8x8xf32> to vector<8x8xf32>
    %c0_154 = arith.constant 0 : index
    %c144_155 = arith.constant 144 : index
    %325 = vector.load %arg13[%c0_154, %c144_155] : memref<8x512xf32, #tpu.memory_space<vmem>>, vector<8x256xf32>
    %c-1_i32_156 = arith.constant -1 : i32
    %326 = vector.broadcast %c-1_i32_156 : i32 to vector<1x256xi32>
    %327 = arith.cmpi sge, %0, %326 : vector<1x256xi32>
    %c15_i32_157 = arith.constant 15 : i32
    %328 = vector.broadcast %c15_i32_157 : i32 to vector<1x256xi32>
    %329 = arith.cmpi slt, %0, %328 : vector<1x256xi32>
    %330 = arith.andi %327, %329 : vector<1x256xi1>
    %c0_i32_158 = arith.constant 0 : i32
    %331 = vector.broadcast %c0_i32_158 : i32 to vector<1x256xi32>
    %332 = arith.cmpi sge, %1, %331 : vector<1x256xi32>
    %c16_i32_159 = arith.constant 16 : i32
    %333 = vector.broadcast %c16_i32_159 : i32 to vector<1x256xi32>
    %334 = arith.cmpi slt, %1, %333 : vector<1x256xi32>
    %335 = arith.andi %332, %334 : vector<1x256xi1>
    %336 = arith.andi %330, %335 : vector<1x256xi1>
    %cst_160 = arith.constant 0.000000e+00 : f32
    %337 = vector.shape_cast %336 : vector<1x256xi1> to vector<1x256xi1>
    %338 = vector.broadcast %337 : vector<1x256xi1> to vector<8x256xi1>
    %339 = vector.broadcast %cst_160 : f32 to vector<8x256xf32>
    %340 = arith.select %338, %325, %339 : vector<8x256xi1>, vector<8x256xf32>
    %cst_161 = arith.constant dense<0.000000e+00> : vector<8x256xf32>
    %341 = tpu.matmul %324, %340, %cst_161 {dimension_numbers = #tpu.dot_dimension_numbers<[1], [0], [0], [1], [0, 0, 1, 1], [], []>} : vector<8x8xf32>, vector<8x256xf32>, vector<8x256xf32> -> vector<8x256xf32>
    %342 = arith.addf %322, %341 : vector<8x256xf32>
    %c8_162 = arith.constant 8 : index
    %c0_163 = arith.constant 0 : index
    %c0_164 = arith.constant 0 : index
    %343 = vector.load %arg7[%c8_162, %c0_163, %c0_164] : memref<9x8x8xf32, #tpu.memory_space<vmem>>, vector<1x8x8xf32>
    %344 = vector.shape_cast %343 : vector<1x8x8xf32> to vector<8x8xf32>
    %c0_165 = arith.constant 0 : index
    %c145_166 = arith.constant 145 : index
    %345 = vector.load %arg13[%c0_165, %c145_166] : memref<8x512xf32, #tpu.memory_space<vmem>>, vector<8x256xf32>
    %c-1_i32_167 = arith.constant -1 : i32
    %346 = vector.broadcast %c-1_i32_167 : i32 to vector<1x256xi32>
    %347 = arith.cmpi sge, %0, %346 : vector<1x256xi32>
    %c15_i32_168 = arith.constant 15 : i32
    %348 = vector.broadcast %c15_i32_168 : i32 to vector<1x256xi32>
    %349 = arith.cmpi slt, %0, %348 : vector<1x256xi32>
    %350 = arith.andi %347, %349 : vector<1x256xi1>
    %c-1_i32_169 = arith.constant -1 : i32
    %351 = vector.broadcast %c-1_i32_169 : i32 to vector<1x256xi32>
    %352 = arith.cmpi sge, %1, %351 : vector<1x256xi32>
    %c15_i32_170 = arith.constant 15 : i32
    %353 = vector.broadcast %c15_i32_170 : i32 to vector<1x256xi32>
    %354 = arith.cmpi slt, %1, %353 : vector<1x256xi32>
    %355 = arith.andi %352, %354 : vector<1x256xi1>
    %356 = arith.andi %350, %355 : vector<1x256xi1>
    %cst_171 = arith.constant 0.000000e+00 : f32
    %357 = vector.shape_cast %356 : vector<1x256xi1> to vector<1x256xi1>
    %358 = vector.broadcast %357 : vector<1x256xi1> to vector<8x256xi1>
    %359 = vector.broadcast %cst_171 : f32 to vector<8x256xf32>
    %360 = arith.select %358, %345, %359 : vector<8x256xi1>, vector<8x256xf32>
    %cst_172 = arith.constant dense<0.000000e+00> : vector<8x256xf32>
    %361 = tpu.matmul %344, %360, %cst_172 {dimension_numbers = #tpu.dot_dimension_numbers<[1], [0], [0], [1], [0, 0, 1, 1], [], []>} : vector<8x8xf32>, vector<8x256xf32>, vector<8x256xf32> -> vector<8x256xf32>
    %362 = arith.addf %342, %361 : vector<8x256xf32>
    %c0_173 = arith.constant 0 : index
    %c0_174 = arith.constant 0 : index
    %363 = vector.load %arg8[%c0_173, %c0_174] : memref<8x1xf32, #tpu.memory_space<vmem>>, vector<8x1xf32>
    %364 = vector.broadcast %363 : vector<8x1xf32> to vector<8x256xf32>
    %365 = arith.mulf %362, %364 : vector<8x256xf32>
    %c0_175 = arith.constant 0 : index
    %c0_176 = arith.constant 0 : index
    %366 = vector.load %arg9[%c0_175, %c0_176] : memref<8x1xf32, #tpu.memory_space<vmem>>, vector<8x1xf32>
    %367 = vector.broadcast %366 : vector<8x1xf32> to vector<8x256xf32>
    %368 = arith.addf %365, %367 : vector<8x256xf32>
    %cst_177 = arith.constant 0.000000e+00 : f32
    %369 = vector.broadcast %cst_177 : f32 to vector<8x256xf32>
    %370 = arith.cmpf oge, %368, %369 : vector<8x256xf32>
    %c0_178 = arith.constant 0 : index
    %c0_179 = arith.constant 0 : index
    %371 = vector.load %arg10[%c0_178, %c0_179] : memref<8x1xf32, #tpu.memory_space<vmem>>, vector<8x1xf32>
    %372 = vector.broadcast %371 : vector<8x1xf32> to vector<8x256xf32>
    %373 = arith.mulf %372, %368 : vector<8x256xf32>
    %374 = arith.select %370, %368, %373 : vector<8x256xi1>, vector<8x256xf32>
    %375 = vector.broadcast %195 : vector<8x1xf32> to vector<8x256xf32>
    %376 = arith.mulf %374, %375 : vector<8x256xf32>
    %c0_180 = arith.constant 0 : index
    %c0_181 = arith.constant 0 : index
    %c0_182 = arith.constant 0 : index
    %377 = vector.load %arg12[%c0_180, %c0_181, %c0_182] : memref<1x8x256xf32, #tpu.memory_space<vmem>>, vector<1x8x256xf32>
    %378 = vector.shape_cast %377 : vector<1x8x256xf32> to vector<8x256xf32>
    %379 = vector.shape_cast %376 : vector<8x256xf32> to vector<1x8x256xf32>
    tpu.vector_store %arg12[%c0_180, %c0_181, %c0_182], %379 {strides = array<i32>} : memref<1x8x256xf32, #tpu.memory_space<vmem>>, vector<1x8x256xf32>,
    return
  }
  func.func @transform_0(%arg0: i32) -> (i32, i32, i32) {
    %c0_i32 = arith.constant 0 : i32
    %c0_i32_0 = arith.constant 0 : i32
    %c0_i32_1 = arith.constant 0 : i32
    return %arg0, %c0_i32, %c0_i32_0 : i32, i32, i32
  }
  func.func @transform_1(%arg0: i32) -> (i32, i32) {
    %c0_i32 = arith.constant 0 : i32
    %c0_i32_0 = arith.constant 0 : i32
    %c0_i32_1 = arith.constant 0 : i32
    return %c0_i32, %c0_i32_0 : i32, i32
  }
  func.func @transform_2(%arg0: i32) -> (i32, i32) {
    %c0_i32 = arith.constant 0 : i32
    %c0_i32_0 = arith.constant 0 : i32
    %c0_i32_1 = arith.constant 0 : i32
    return %c0_i32, %c0_i32_0 : i32, i32
  }
  func.func @transform_3(%arg0: i32) -> (i32, i32) {
    %c0_i32 = arith.constant 0 : i32
    %c0_i32_0 = arith.constant 0 : i32
    %c0_i32_1 = arith.constant 0 : i32
    return %c0_i32, %c0_i32_0 : i32, i32
  }
  func.func @transform_4(%arg0: i32) -> (i32, i32) {
    %c0_i32 = arith.constant 0 : i32
    %c0_i32_0 = arith.constant 0 : i32
    %c0_i32_1 = arith.constant 0 : i32
    return %c0_i32, %c0_i32_0 : i32, i32
  }
  func.func @transform_5(%arg0: i32) -> (i32, i32) {
    %c0_i32 = arith.constant 0 : i32
    %c0_i32_0 = arith.constant 0 : i32
    %c0_i32_1 = arith.constant 0 : i32
    return %c0_i32, %c0_i32_0 : i32, i32
  }
  func.func @transform_6(%arg0: i32) -> (i32, i32, i32) {
    %c0_i32 = arith.constant 0 : i32
    %c0_i32_0 = arith.constant 0 : i32
    %c0_i32_1 = arith.constant 0 : i32
    %c0_i32_2 = arith.constant 0 : i32
    return %c0_i32, %c0_i32_0, %c0_i32_1 : i32, i32, i32
  }
  func.func @transform_7(%arg0: i32) -> (i32, i32) {
    %c0_i32 = arith.constant 0 : i32
    %c0_i32_0 = arith.constant 0 : i32
    %c0_i32_1 = arith.constant 0 : i32
    return %c0_i32, %c0_i32_0 : i32, i32
  }
  func.func @transform_8(%arg0: i32) -> (i32, i32) {
    %c0_i32 = arith.constant 0 : i32
    %c0_i32_0 = arith.constant 0 : i32
    %c0_i32_1 = arith.constant 0 : i32
    return %c0_i32, %c0_i32_0 : i32, i32
  }
  func.func @transform_9(%arg0: i32) -> (i32, i32) {
    %c0_i32 = arith.constant 0 : i32
    %c0_i32_0 = arith.constant 0 : i32
    %c0_i32_1 = arith.constant 0 : i32
    return %c0_i32, %c0_i32_0 : i32, i32
  }
  func.func @transform_10(%arg0: i32) -> (i32, i32) {
    %c0_i32 = arith.constant 0 : i32
    %c0_i32_0 = arith.constant 0 : i32
    %c0_i32_1 = arith.constant 0 : i32
    return %c0_i32, %c0_i32_0 : i32, i32
  }
  func.func @transform_11(%arg0: i32) -> (i32, i32, i32) {
    %c0_i32 = arith.constant 0 : i32
    %c0_i32_0 = arith.constant 0 : i32
    %c0_i32_1 = arith.constant 0 : i32
    return %arg0, %c0_i32, %c0_i32_0 : i32, i32, i32
  }
}

</mosaic_0001>

<llo_original>
// kernel: tpu_custom_call.1
$region0: #{tpu_custom_call.1}
  #allocation0 [shape = 'u32[]', space=smem, size = 0x4, offset = 0x4, fixed_abs, tag = 'smem constant byte address 0x4 - core index']
  #allocation1 [shape = 'u32[72,128]{1,0:T(1,128)}', space=vmem, size = 0x9000, scoped, tag = 'internal scratch']
  #allocation2 [shape = 'f32[8,512]{1,0:T(8,128)}', space=vmem, size = 0x4000, scoped, tag = 'scratch operand']
  %s0 = inlined_call_operand.vmem [shape: f32[2,8,256], index: 0, kind: input, shape index: {}]
  %s1 = inlined_call_operand.vmem [shape: s32[2,256], index: 1, kind: input, shape index: {}]
  %s2 = inlined_call_operand.vmem [shape: f32[8,9], index: 2, kind: input, shape index: {}]
  %s3 = inlined_call_operand.vmem [shape: f32[8,1], index: 3, kind: input, shape index: {}]
  %s4 = inlined_call_operand.vmem [shape: f32[8,1], index: 4, kind: input, shape index: {}]
  %s5 = inlined_call_operand.vmem [shape: f32[8,1], index: 5, kind: input, shape index: {}]
  %s6 = inlined_call_operand.vmem [shape: f32[9,8,8], index: 6, kind: input, shape index: {}]
  %s7 = inlined_call_operand.vmem [shape: f32[8,1], index: 7, kind: input, shape index: {}]
  %s8 = inlined_call_operand.vmem [shape: f32[8,1], index: 8, kind: input, shape index: {}]
  %s9 = inlined_call_operand.vmem [shape: f32[8,1], index: 9, kind: input, shape index: {}]
  %s10 = inlined_call_operand.vmem [shape: f32[8,8], index: 10, kind: input, shape index: {}]
  %s11 = inlined_call_operand.hbm [shape: f32[2,8,256], index: 11, kind: output, shape index: {}]
  %s12 = sld [smem:[#allocation0]]
  $region77: #{tpu_custom_call.1} parent=0
    _
  %s14 = ssub.s32 1, %s12
  %s15 = scalar_select 0, %s14, %s12
  $region1: #{tpu_custom_call.1} parent=0
    #allocation3 [shape = 'u8[16384]{0}', space=vmem, size = 0x4000, scoped, tag = 'output window, operand 0']
    #allocation4 [shape = 's32[2]{0}', space=sflag, size = 0x8, scoped, tag = 'scoped memory for tpu_custom_call.1']
    %16 = vsyncpa [#allocation4], 0
    %s17 = scalar_lea.sflag [#allocation4], 1
    %18 = vsyncpa %s17, 0
    loop: start=0, step=1, limit=4
    $region2: #{tpu_custom_call.1} parent=1 // loop_pre_header
      _
    $region3: #{tpu_custom_call.1} parent=1 // loop_header
      %s20 = sphi 0, %s24
      %p21 = scmp.ge.s32.totalorder %s20, 4
      %s30 = sphi 0, %s32
      %s33 = sphi 0, %s30
      %s34 = sphi 0, %s33
      %s50 = sphi 0, %s34
      %s54 = sphi 0, %s54
      %s56 = sphi 0, %s54
      %s57 = sphi 0, %s56
      %s71 = sphi 0, %s57
      %s75 = sphi 0, %s75
      %s77 = sphi 0, %s75
      %s78 = sphi 0, %s77
      %s92 = sphi 0, %s78
      %s96 = sphi 0, %s96
      %s98 = sphi 0, %s96
      %s99 = sphi 0, %s98
      %s113 = sphi 0, %s99
      %s117 = sphi 0, %s117
      %s119 = sphi 0, %s117
      %s120 = sphi 0, %s119
      %s134 = sphi 0, %s120
      %s138 = sphi 0, %s138
      %s140 = sphi 0, %s138
      %s141 = sphi 0, %s140
      %s155 = sphi 0, %s141
      %s159 = sphi 0, %s159
      %s161 = sphi 0, %s159
      %s162 = sphi 0, %s161
      %s176 = sphi 0, %s162
      %s180 = sphi 0, %s180
      %s182 = sphi 0, %s180
      %s183 = sphi 0, %s182
      %s197 = sphi 0, %s183
      %s201 = sphi 0, %s201
      %s203 = sphi 0, %s201
      %s204 = sphi 0, %s203
      %s218 = sphi 0, %s204
      %s222 = sphi 0, %s222
      %s224 = sphi 0, %s222
      %s225 = sphi 0, %s224
      %s239 = sphi 0, %s225
      %s243 = sphi 0, %s243
      %s245 = sphi 0, %s243
      %s246 = sphi 0, %s245
      %s260 = sphi 0, %s246
      %s266 = sphi 0, %s268
      %s269 = sphi 0, %s266
      %s270 = sphi 0, %s269
      %s286 = sphi 0, %s270
    $region4: #{tpu_custom_call.1} parent=1 // loop_header_branch
      %23 = sbr.rel (%p21) target = $region8
    $region5: #{tpu_custom_call.1} parent=1 // loop_body
      %s25 = ssub.s32 %s20, 1
      %s26 = ssub.s32 %s20, 2
      %s27 = sadd.s32 %s20, 1
      %s28 = ssub.s32 %s20, %s27
      %p29 = scmp.eq.s32.totalorder %s28, 0
      %s31 = sadd.s32 %s30, 1
      %s32 = scalar_select %p29, %s30, %s31
      %p35 = pneg %p29
      %p36 = scmp.eq.s32.totalorder %s20, 1
      %p37 = por %p35, %p36
      %p38 = scmp.ne.s32.totalorder %s30, %s33
      %p39 = scmp.eq.s32.totalorder %s20, 0
      %p40 = por %p38, %p39
      %p41 = scmp.ne.s32.totalorder %s30, %s33
      %p42 = scmp.eq.s32.totalorder %s25, 1
      %p43 = por %p41, %p42
      %p44 = scmp.ne.s32.totalorder %s33, %s34
      %p45 = scmp.eq.s32.totalorder %s25, 0
      %p46 = por %p44, %p45
      %p47 = scmp.ne.s32.totalorder %s33, %s34
      %p48 = scmp.eq.s32.totalorder %s26, 1
      %p49 = por %p47, %p48
      %p51 = scmp.ne.s32.totalorder %s34, %s50
      %p52 = scmp.eq.s32.totalorder %s26, 0
      %p53 = por %p51, %p52
      %s55 = sadd.s32 %s54, 1
      %p58 = scmp.eq.s32.totalorder %s20, 1
      %p59 = scmp.ne.s32.totalorder %s54, %s56
      %p60 = scmp.eq.s32.totalorder %s20, 0
      %p61 = por %p59, %p60
      %p62 = scmp.ne.s32.totalorder %s54, %s56
      %p63 = scmp.eq.s32.totalorder %s25, 1
      %p64 = por %p62, %p63
      %p65 = scmp.ne.s32.totalorder %s56, %s57
      %p66 = scmp.eq.s32.totalorder %s25, 0
      %p67 = por %p65, %p66
      %p68 = scmp.ne.s32.totalorder %s56, %s57
      %p69 = scmp.eq.s32.totalorder %s26, 1
      %p70 = por %p68, %p69
      %p72 = scmp.ne.s32.totalorder %s57, %s71
      %p73 = scmp.eq.s32.totalorder %s26, 0
      %p74 = por %p72, %p73
      %s76 = sadd.s32 %s75, 1
      %p79 = scmp.eq.s32.totalorder %s20, 1
      %p80 = scmp.ne.s32.totalorder %s75, %s77
      %p81 = scmp.eq.s32.totalorder %s20, 0
      %p82 = por %p80, %p81
      %p83 = scmp.ne.s32.totalorder %s75, %s77
      %p84 = scmp.eq.s32.totalorder %s25, 1
      %p85 = por %p83, %p84
      %p86 = scmp.ne.s32.totalorder %s77, %s78
      %p87 = scmp.eq.s32.totalorder %s25, 0
      %p88 = por %p86, %p87
      %p89 = scmp.ne.s32.totalorder %s77, %s78
      %p90 = scmp.eq.s32.totalorder %s26, 1
      %p91 = por %p89, %p90
      %p93 = scmp.ne.s32.totalorder %s78, %s92
      %p94 = scmp.eq.s32.totalorder %s26, 0
      %p95 = por %p93, %p94
      %s97 = sadd.s32 %s96, 1
      %p100 = scmp.eq.s32.totalorder %s20, 1
      %p101 = scmp.ne.s32.totalorder %s96, %s98
      %p102 = scmp.eq.s32.totalorder %s20, 0
      %p103 = por %p101, %p102
      %p104 = scmp.ne.s32.totalorder %s96, %s98
      %p105 = scmp.eq.s32.totalorder %s25, 1
      %p106 = por %p104, %p105
      %p107 = scmp.ne.s32.totalorder %s98, %s99
      %p108 = scmp.eq.s32.totalorder %s25, 0
      %p109 = por %p107, %p108
      %p110 = scmp.ne.s32.totalorder %s98, %s99
      %p111 = scmp.eq.s32.totalorder %s26, 1
      %p112 = por %p110, %p111
      %p114 = scmp.ne.s32.totalorder %s99, %s113
      %p115 = scmp.eq.s32.totalorder %s26, 0
      %p116 = por %p114, %p115
      %s118 = sadd.s32 %s117, 1
      %p121 = scmp.eq.s32.totalorder %s20, 1
      %p122 = scmp.ne.s32.totalorder %s117, %s119
      %p123 = scmp.eq.s32.totalorder %s20, 0
      %p124 = por %p122, %p123
      %p125 = scmp.ne.s32.totalorder %s117, %s119
      %p126 = scmp.eq.s32.totalorder %s25, 1
      %p127 = por %p125, %p126
      %p128 = scmp.ne.s32.totalorder %s119, %s120
      %p129 = scmp.eq.s32.totalorder %s25, 0
      %p130 = por %p128, %p129
      %p131 = scmp.ne.s32.totalorder %s119, %s120
      %p132 = scmp.eq.s32.totalorder %s26, 1
      %p133 = por %p131, %p132
      %p135 = scmp.ne.s32.totalorder %s120, %s134
      %p136 = scmp.eq.s32.totalorder %s26, 0
      %p137 = por %p135, %p136
      %s139 = sadd.s32 %s138, 1
      %p142 = scmp.eq.s32.totalorder %s20, 1
      %p143 = scmp.ne.s32.totalorder %s138, %s140
      %p144 = scmp.eq.s32.totalorder %s20, 0
      %p145 = por %p143, %p144
      %p146 = scmp.ne.s32.totalorder %s138, %s140
      %p147 = scmp.eq.s32.totalorder %s25, 1
      %p148 = por %p146, %p147
      %p149 = scmp.ne.s32.totalorder %s140, %s141
      %p150 = scmp.eq.s32.totalorder %s25, 0
      %p151 = por %p149, %p150
      %p152 = scmp.ne.s32.totalorder %s140, %s141
      %p153 = scmp.eq.s32.totalorder %s26, 1
      %p154 = por %p152, %p153
      %p156 = scmp.ne.s32.totalorder %s141, %s155
      %p157 = scmp.eq.s32.totalorder %s26, 0
      %p158 = por %p156, %p157
      %s160 = sadd.s32 %s159, 1
      %p163 = scmp.eq.s32.totalorder %s20, 1
      %p164 = scmp.ne.s32.totalorder %s159, %s161
      %p165 = scmp.eq.s32.totalorder %s20, 0
      %p166 = por %p164, %p165
      %p167 = scmp.ne.s32.totalorder %s159, %s161
      %p168 = scmp.eq.s32.totalorder %s25, 1
      %p169 = por %p167, %p168
      %p170 = scmp.ne.s32.totalorder %s161, %s162
      %p171 = scmp.eq.s32.totalorder %s25, 0
      %p172 = por %p170, %p171
      %p173 = scmp.ne.s32.totalorder %s161, %s162
      %p174 = scmp.eq.s32.totalorder %s26, 1
      %p175 = por %p173, %p174
      %p177 = scmp.ne.s32.totalorder %s162, %s176
      %p178 = scmp.eq.s32.totalorder %s26, 0
      %p179 = por %p177, %p178
      %s181 = sadd.s32 %s180, 1
      %p184 = scmp.eq.s32.totalorder %s20, 1
      %p185 = scmp.ne.s32.totalorder %s180, %s182
      %p186 = scmp.eq.s32.totalorder %s20, 0
      %p187 = por %p185, %p186
      %p188 = scmp.ne.s32.totalorder %s180, %s182
      %p189 = scmp.eq.s32.totalorder %s25, 1
      %p190 = por %p188, %p189
      %p191 = scmp.ne.s32.totalorder %s182, %s183
      %p192 = scmp.eq.s32.totalorder %s25, 0
      %p193 = por %p191, %p192
      %p194 = scmp.ne.s32.totalorder %s182, %s183
      %p195 = scmp.eq.s32.totalorder %s26, 1
      %p196 = por %p194, %p195
      %p198 = scmp.ne.s32.totalorder %s183, %s197
      %p199 = scmp.eq.s32.totalorder %s26, 0
      %p200 = por %p198, %p199
      %s202 = sadd.s32 %s201, 1
      %p205 = scmp.eq.s32.totalorder %s20, 1
      %p206 = scmp.ne.s32.totalorder %s201, %s203
      %p207 = scmp.eq.s32.totalorder %s20, 0
      %p208 = por %p206, %p207
      %p209 = scmp.ne.s32.totalorder %s201, %s203
      %p210 = scmp.eq.s32.totalorder %s25, 1
      %p211 = por %p209, %p210
      %p212 = scmp.ne.s32.totalorder %s203, %s204
      %p213 = scmp.eq.s32.totalorder %s25, 0
      %p214 = por %p212, %p213
      %p215 = scmp.ne.s32.totalorder %s203, %s204
      %p216 = scmp.eq.s32.totalorder %s26, 1
      %p217 = por %p215, %p216
      %p219 = scmp.ne.s32.totalorder %s204, %s218
      %p220 = scmp.eq.s32.totalorder %s26, 0
      %p221 = por %p219, %p220
      %s223 = sadd.s32 %s222, 1
      %p226 = scmp.eq.s32.totalorder %s20, 1
      %p227 = scmp.ne.s32.totalorder %s222, %s224
      %p228 = scmp.eq.s32.totalorder %s20, 0
      %p229 = por %p227, %p228
      %p230 = scmp.ne.s32.totalorder %s222, %s224
      %p231 = scmp.eq.s32.totalorder %s25, 1
      %p232 = por %p230, %p231
      %p233 = scmp.ne.s32.totalorder %s224, %s225
      %p234 = scmp.eq.s32.totalorder %s25, 0
      %p235 = por %p233, %p234
      %p236 = scmp.ne.s32.totalorder %s224, %s225
      %p237 = scmp.eq.s32.totalorder %s26, 1
      %p238 = por %p236, %p237
      %p240 = scmp.ne.s32.totalorder %s225, %s239
      %p241 = scmp.eq.s32.totalorder %s26, 0
      %p242 = por %p240, %p241
      %s244 = sadd.s32 %s243, 1
      %p247 = scmp.eq.s32.totalorder %s20, 1
      %p248 = scmp.ne.s32.totalorder %s243, %s245
      %p249 = scmp.eq.s32.totalorder %s20, 0
      %p250 = por %p248, %p249
      %p251 = scmp.ne.s32.totalorder %s243, %s245
      %p252 = scmp.eq.s32.totalorder %s25, 1
      %p253 = por %p251, %p252
      %p254 = scmp.ne.s32.totalorder %s245, %s246
      %p255 = scmp.eq.s32.totalorder %s25, 0
      %p256 = por %p254, %p255
      %p257 = scmp.ne.s32.totalorder %s245, %s246
      %p258 = scmp.eq.s32.totalorder %s26, 1
      %p259 = por %p257, %p258
      %p261 = scmp.ne.s32.totalorder %s246, %s260
      %p262 = scmp.eq.s32.totalorder %s26, 0
      %p263 = por %p261, %p262
      %s264 = ssub.s32 %s20, %s27
      %p265 = scmp.eq.s32.totalorder %s264, 0
      %s267 = sadd.s32 %s266, 1
      %s268 = scalar_select %p265, %s266, %s267
      %p271 = pneg %p265
      %p272 = scmp.eq.s32.totalorder %s20, 1
      %p273 = por %p271, %p272
      %p274 = scmp.ne.s32.totalorder %s266, %s269
      %p275 = scmp.eq.s32.totalorder %s20, 0
      %p276 = por %p274, %p275
      %p277 = scmp.ne.s32.totalorder %s266, %s269
      %p278 = scmp.eq.s32.totalorder %s25, 1
      %p279 = por %p277, %p278
      %p280 = scmp.ne.s32.totalorder %s269, %s270
      %p281 = scmp.eq.s32.totalorder %s25, 0
      %p282 = por %p280, %p281
      %p283 = scmp.ne.s32.totalorder %s269, %s270
      %p284 = scmp.eq.s32.totalorder %s26, 1
      %p285 = por %p283, %p284
      %p287 = scmp.ne.s32.totalorder %s270, %s286
      %p288 = scmp.eq.s32.totalorder %s26, 0
      %p289 = por %p287, %p288
      %p290 = scmp.le.s32.totalorder 1, %s20
      %p291 = scmp.lt.s32.totalorder %s20, 3
      %p292 = pnand %p290, %p291
      %p293 = pneg %p292
      // Predicated region
      $region9: #{tpu_custom_call.1} parent=5 // pred_check
        _
      $region10: #{tpu_custom_call.1} parent=5 // pred_check_branch
        %295 = sbr.rel (%p292) target = $region12
      $region11: #{tpu_custom_call.1} parent=5 // pred_region
        %s296 = ssub.s32 %s20, 1
        // Predicated region
        $region13: #{tpu_custom_call.1} parent=11 // pred_check
          %p297 = pneg %p67
        $region14: #{tpu_custom_call.1} parent=11 // pred_check_branch
          %299 = sbr.rel (%p297) target = $region16
        $region15: #{tpu_custom_call.1} parent=11 // pred_region
          _
        $region16: #{tpu_custom_call.1} parent=11 // pred_fallthru
          _
        // Predicated region
        $region17: #{tpu_custom_call.1} parent=11 // pred_check
          %p300 = pneg %p88
        $region18: #{tpu_custom_call.1} parent=11 // pred_check_branch
          %302 = sbr.rel (%p300) target = $region20
        $region19: #{tpu_custom_call.1} parent=11 // pred_region
          _
        $region20: #{tpu_custom_call.1} parent=11 // pred_fallthru
          _
        // Predicated region
        $region21: #{tpu_custom_call.1} parent=11 // pred_check
          %p303 = pneg %p109
        $region22: #{tpu_custom_call.1} parent=11 // pred_check_branch
          %305 = sbr.rel (%p303) target = $region24
        $region23: #{tpu_custom_call.1} parent=11 // pred_region
          _
        $region24: #{tpu_custom_call.1} parent=11 // pred_fallthru
          _
        // Predicated region
        $region25: #{tpu_custom_call.1} parent=11 // pred_check
          %p306 = pneg %p130
        $region26: #{tpu_custom_call.1} parent=11 // pred_check_branch
          %308 = sbr.rel (%p306) target = $region28
        $region27: #{tpu_custom_call.1} parent=11 // pred_region
          _
        $region28: #{tpu_custom_call.1} parent=11 // pred_fallthru
          _
        // Predicated region
        $region29: #{tpu_custom_call.1} parent=11 // pred_check
          %p309 = pneg %p151
        $region30: #{tpu_custom_call.1} parent=11 // pred_check_branch
          %311 = sbr.rel (%p309) target = $region32
        $region31: #{tpu_custom_call.1} parent=11 // pred_region
          _
        $region32: #{tpu_custom_call.1} parent=11 // pred_fallthru
          _
        // Predicated region
        $region33: #{tpu_custom_call.1} parent=11 // pred_check
          %p312 = pneg %p172
        $region34: #{tpu_custom_call.1} parent=11 // pred_check_branch
          %314 = sbr.rel (%p312) target = $region36
        $region35: #{tpu_custom_call.1} parent=11 // pred_region
          _
        $region36: #{tpu_custom_call.1} parent=11 // pred_fallthru
          _
        // Predicated region
        $region37: #{tpu_custom_call.1} parent=11 // pred_check
          %p315 = pneg %p193
        $region38: #{tpu_custom_call.1} parent=11 // pred_check_branch
          %317 = sbr.rel (%p315) target = $region40
        $region39: #{tpu_custom_call.1} parent=11 // pred_region
          _
        $region40: #{tpu_custom_call.1} parent=11 // pred_fallthru
          _
        // Predicated region
        $region41: #{tpu_custom_call.1} parent=11 // pred_check
          %p318 = pneg %p214
        $region42: #{tpu_custom_call.1} parent=11 // pred_check_branch
          %320 = sbr.rel (%p318) target = $region44
        $region43: #{tpu_custom_call.1} parent=11 // pred_region
          _
        $region44: #{tpu_custom_call.1} parent=11 // pred_fallthru
          _
        // Predicated region
        $region45: #{tpu_custom_call.1} parent=11 // pred_check
          %p321 = pneg %p235
        $region46: #{tpu_custom_call.1} parent=11 // pred_check_branch
          %323 = sbr.rel (%p321) target = $region48
        $region47: #{tpu_custom_call.1} parent=11 // pred_region
          _
        $region48: #{tpu_custom_call.1} parent=11 // pred_fallthru
          _
        // Predicated region
        $region49: #{tpu_custom_call.1} parent=11 // pred_check
          %p324 = pneg %p256
        $region50: #{tpu_custom_call.1} parent=11 // pred_check_branch
          %326 = sbr.rel (%p324) target = $region52
        $region51: #{tpu_custom_call.1} parent=11 // pred_region
          _
        $region52: #{tpu_custom_call.1} parent=11 // pred_fallthru
          _
      $region12: #{tpu_custom_call.1} parent=5 // pred_fallthru
        _
      %p327 = scmp.lt.s32.totalorder %s20, 2
      // Predicated region
      $region53: #{tpu_custom_call.1} parent=5 // pred_check
        %p328 = pneg %p327
      $region54: #{tpu_custom_call.1} parent=5 // pred_check_branch
        %330 = sbr.rel (%p328) target = $region56
      $region55: #{tpu_custom_call.1} parent=5 // pred_region
        // Predicated region
        $region57: #{tpu_custom_call.1} parent=55 // pred_check
          %p331 = pneg %p40
        $region58: #{tpu_custom_call.1} parent=55 // pred_check_branch
          %333 = sbr.rel (%p331) target = $region60
        $region59: #{tpu_custom_call.1} parent=55 // pred_region
          %p334 = scmp.lt.s32.totalorder %s20, 1
          %s335 = scalar_select %p334, %s20, 1
          %s336 = smul.addr %s335, 2
          %s337 = smul.addr %s336, 8
          %s338 = scalar_lea.vmem %s0, %s337
        $region60: #{tpu_custom_call.1} parent=55 // pred_fallthru
          _
      $region56: #{tpu_custom_call.1} parent=5 // pred_fallthru
        _
      %p339 = scmp.le.s32.totalorder 1, %s20
      %p340 = scmp.lt.s32.totalorder %s20, 3
      %p341 = pnand %p339, %p340
      %p342 = pneg %p341
      // Predicated region
      $region61: #{tpu_custom_call.1} parent=5 // pred_check
        _
      $region62: #{tpu_custom_call.1} parent=5 // pred_check_branch
        %344 = sbr.rel (%p341) target = $region64
      $region63: #{tpu_custom_call.1} parent=5 // pred_region
        %s345 = ssub.s32 %s20, 1
        %p346 = scmp.lt.s32.totalorder %s25, 1
        %s347 = scalar_select %p346, %s25, 1
        %s348 = smul.addr %s347, 2
        %s349 = smul.addr %s348, 8
        %s350 = scalar_lea.vmem %s0, %s349
        %p351 = pneg %p46
        %p352 = pneg %p43
        %p353 = pneg %p67
        %p354 = pneg %p64
        %p355 = pneg %p88
        %p356 = pneg %p85
        %p357 = pneg %p109
        %p358 = pneg %p106
        %p359 = pneg %p130
        %p360 = pneg %p127
        %p361 = pneg %p151
        %p362 = pneg %p148
        %p363 = pneg %p172
        %p364 = pneg %p169
        %p365 = pneg %p193
        %p366 = pneg %p190
        %p367 = pneg %p214
        %p368 = pneg %p211
        %p369 = pneg %p235
        %p370 = pneg %p232
        %p371 = pneg %p256
        %p372 = pneg %p253
        %p373 = pneg %p282
        %p374 = pneg %p279
        %s375 = sand.u32 %s269, 1
        %s376 = scalar_lea.sflag [#allocation4], %s375
        %s377 = sand.u32 %s269, 1
        %s378 = smul.addr %s377, 16
        %s379 = scalar_lea.vmem [#allocation3], %s378
        %p380 = scmp.lt.s32.totalorder %s25, 1
        %s381 = scalar_select %p380, %s25, 1
        %s382 = smul.addr %s381, 2
        %s383 = smul.addr %s382, 8
        %s384 = scalar_lea.vmem %s0, %s383
        %v385 = vld [vmem:[%s1] ss:$2 sm:$0x3]
        %s386 = scalar_lea.vmem %s1, 1
        %v387 = vld [vmem:[%s386] ss:$2 sm:$0x3]
        %v388 = vld [vmem:[%s384] sm:$0xff]
        %v389 = vld [vmem:[%s384 + $0x8] sm:$0xff]
        %390 = vst [vmem:[#allocation2 + $0x8] sm:$0xff] %v388
        %391 = vst [vmem:[#allocation2 + $0x10] sm:$0xff] %v389
        %v392 = vld [vmem:[%s2] sm:$0xff]
        %v393 = vld [vmem:[#allocation2] sm:$0xff]
        %v394 = vld [vmem:[#allocation2 + $0x8] sm:$0xff]
        %v395 = vld [vmem:[#allocation2 + $0x10] sm:$0xff]
        %vm396 = vcmp.ge.s32.totalorder %v385, 1
        %vm397 = vcmp.lt.s32.totalorder %v385, 17
        %vm398 = vmand %vm396, %vm397
        %vm399 = vcmp.ge.s32.totalorder %v387, 1
        %vm400 = vcmp.lt.s32.totalorder %v387, 17
        %vm401 = vmand %vm399, %vm400
        %vm402 = vmand %vm398, %vm401
        %v403 = vsel %vm402, 1, 0
        %v404 = vperm.slane %v403, 0
        %v405 = vperm.slane %v403, 1
        %vm406 = vcmp.eq.s32.totalorder %v404, 1
        %vm407 = vcmp.eq.s32.totalorder %v405, 1
        %411 = vrot.lane.b32.xlu0 %v393, 17
        %v412 = vpop.permute.xlu0 %411
        %413 = vrot.lane.b32.xlu0 %v394, 17
        %v414 = vpop.permute.xlu0 %413
        %415 = vrot.lane.b32.xlu0 %v395, 17
        %v416 = vpop.permute.xlu0 %415
        %vm417 = vcmask 138240
        %v418 = vsel %vm417, %v412, %v414
        %v419 = vsel %vm417, %v414, %v416
        %v422 = vsel %vm406, %v418, 0.0
        %v423 = vsel %vm407, %v419, 0.0
        %425 = vset.pattern.permute.xlu0 0
        %426 = vperm.xlu0 %425, %v392
        %v427 = vpop.permute.xlu0 %426
        %v429 = vmul.f32 %v422, %v427
        %v430 = vmul.f32 %v423, %v427
        %v431 = vadd.f32 %v429, 0.0
        %v432 = vadd.f32 %v430, 0.0
        %vm433 = vcmp.ge.s32.totalorder %v387, 0
        %vm434 = vcmp.lt.s32.totalorder %v387, 16
        %vm435 = vmand %vm433, %vm434
        %vm436 = vmand %vm398, %vm435
        %v437 = vsel %vm436, 1, 0
        %v438 = vperm.slane %v437, 0
        %v439 = vperm.slane %v437, 1
        %vm440 = vcmp.eq.s32.totalorder %v438, 1
        %vm441 = vcmp.eq.s32.totalorder %v439, 1
        %442 = vrot.lane.b32.xlu0 %v393, 16
        %v443 = vpop.permute.xlu0 %442
        %444 = vrot.lane.b32.xlu0 %v394, 16
        %v445 = vpop.permute.xlu0 %444
        %446 = vrot.lane.b32.xlu0 %v395, 16
        %v447 = vpop.permute.xlu0 %446
        %vm448 = vcmask 130048
        %v449 = vsel %vm448, %v443, %v445
        %v450 = vsel %vm448, %v445, %v447
        %v453 = vsel %vm440, %v449, 0.0
        %v454 = vsel %vm441, %v450, 0.0
        %455 = vset.pattern.permute.xlu0 1
        %456 = vperm.xlu0 %455, %v392
        %v457 = vpop.permute.xlu0 %456
        %v459 = vmul.f32 %v453, %v457
        %v460 = vmul.f32 %v454, %v457
        %v461 = vadd.f32 %v431, %v459
        %v462 = vadd.f32 %v432, %v460
        %vm463 = vcmp.ge.s32.totalorder %v387, 4294967295
        %vm464 = vcmp.lt.s32.totalorder %v387, 15
        %vm465 = vmand %vm463, %vm464
        %vm466 = vmand %vm398, %vm465
        %v467 = vsel %vm466, 1, 0
        %v468 = vperm.slane %v467, 0
        %v469 = vperm.slane %v467, 1
        %vm470 = vcmp.eq.s32.totalorder %v468, 1
        %vm471 = vcmp.eq.s32.totalorder %v469, 1
        %472 = vrot.lane.b32.xlu0 %v393, 15
        %v473 = vpop.permute.xlu0 %472
        %474 = vrot.lane.b32.xlu0 %v394, 15
        %v475 = vpop.permute.xlu0 %474
        %476 = vrot.lane.b32.xlu0 %v395, 15
        %v477 = vpop.permute.xlu0 %476
        %vm478 = vcmask 121856
        %v479 = vsel %vm478, %v473, %v475
        %v480 = vsel %vm478, %v475, %v477
        %v483 = vsel %vm470, %v479, 0.0
        %v484 = vsel %vm471, %v480, 0.0
        %485 = vset.pattern.permute.xlu0 2
        %486 = vperm.xlu0 %485, %v392
        %v487 = vpop.permute.xlu0 %486
        %v489 = vmul.f32 %v483, %v487
        %v490 = vmul.f32 %v484, %v487
        %v491 = vadd.f32 %v461, %v489
        %v492 = vadd.f32 %v462, %v490
        %vm493 = vcmp.ge.s32.totalorder %v385, 0
        %vm494 = vcmp.lt.s32.totalorder %v385, 16
        %vm495 = vmand %vm493, %vm494
        %vm496 = vmand %vm495, %vm401
        %v497 = vsel %vm496, 1, 0
        %v498 = vperm.slane %v497, 0
        %v499 = vperm.slane %v497, 1
        %vm500 = vcmp.eq.s32.totalorder %v498, 1
        %vm501 = vcmp.eq.s32.totalorder %v499, 1
        %502 = vrot.lane.b32.xlu0 %v393, 1
        %v503 = vpop.permute.xlu0 %502
        %504 = vrot.lane.b32.xlu0 %v394, 1
        %v505 = vpop.permute.xlu0 %504
        %506 = vrot.lane.b32.xlu0 %v395, 1
        %v507 = vpop.permute.xlu0 %506
        %vm508 = vcmask 7168
        %v509 = vsel %vm508, %v503, %v505
        %v510 = vsel %vm508, %v505, %v507
        %v513 = vsel %vm500, %v509, 0.0
        %v514 = vsel %vm501, %v510, 0.0
        %515 = vset.pattern.permute.xlu0 3
        %516 = vperm.xlu0 %515, %v392
        %v517 = vpop.permute.xlu0 %516
        %v519 = vmul.f32 %v513, %v517
        %v520 = vmul.f32 %v514, %v517
        %v521 = vadd.f32 %v491, %v519
        %v522 = vadd.f32 %v492, %v520
        %523 = vset.pattern.permute.xlu0 4
        %524 = vperm.xlu0 %523, %v392
        %v525 = vpop.permute.xlu0 %524
        %v527 = vmul.f32 %v394, %v525
        %v528 = vmul.f32 %v395, %v525
        %v529 = vadd.f32 %v521, %v527
        %v530 = vadd.f32 %v522, %v528
        %v531 = vld [vmem:[#allocation2 + $0x8] sm:$0xff]
        %v532 = vld [vmem:[#allocation2 + $0x10] sm:$0xff]
        %v533 = vld [vmem:[#allocation2 + $0x18] sm:$0xff]
        %vm534 = vmand %vm495, %vm465
        %v535 = vsel %vm534, 1, 0
        %v536 = vperm.slane %v535, 0
        %v537 = vperm.slane %v535, 1
        %vm538 = vcmp.eq.s32.totalorder %v536, 1
        %vm539 = vcmp.eq.s32.totalorder %v537, 1
        %543 = vrot.lane.b32.xlu0 %v531, 127
        %v544 = vpop.permute.xlu0 %543
        %545 = vrot.lane.b32.xlu0 %v532, 127
        %v546 = vpop.permute.xlu0 %545
        %547 = vrot.lane.b32.xlu0 %v533, 127
        %v548 = vpop.permute.xlu0 %547
        %vm549 = vcmask 1039360
        %v550 = vsel %vm549, %v544, %v546
        %v551 = vsel %vm549, %v546, %v548
        %v554 = vsel %vm538, %v550, 0.0
        %v555 = vsel %vm539, %v551, 0.0
        %556 = vset.pattern.permute.xlu0 5
        %557 = vperm.xlu0 %556, %v392
        %v558 = vpop.permute.xlu0 %557
        %v560 = vmul.f32 %v554, %v558
        %v561 = vmul.f32 %v555, %v558
        %v562 = vadd.f32 %v529, %v560
        %v563 = vadd.f32 %v530, %v561
        %vm564 = vcmp.ge.s32.totalorder %v385, 4294967295
        %vm565 = vcmp.lt.s32.totalorder %v385, 15
        %vm566 = vmand %vm564, %vm565
        %vm567 = vmand %vm566, %vm401
        %v568 = vsel %vm567, 1, 0
        %v569 = vperm.slane %v568, 0
        %v570 = vperm.slane %v568, 1
        %vm571 = vcmp.eq.s32.totalorder %v569, 1
        %vm572 = vcmp.eq.s32.totalorder %v570, 1
        %573 = vrot.lane.b32.xlu0 %v531, 113
        %v574 = vpop.permute.xlu0 %573
        %575 = vrot.lane.b32.xlu0 %v532, 113
        %v576 = vpop.permute.xlu0 %575
        %577 = vrot.lane.b32.xlu0 %v533, 113
        %v578 = vpop.permute.xlu0 %577
        %vm579 = vcmask 924672
        %v580 = vsel %vm579, %v574, %v576
        %v581 = vsel %vm579, %v576, %v578
        %v584 = vsel %vm571, %v580, 0.0
        %v585 = vsel %vm572, %v581, 0.0
        %586 = vset.pattern.permute.xlu0 6
        %587 = vperm.xlu0 %586, %v392
        %v588 = vpop.permute.xlu0 %587
        %v590 = vmul.f32 %v584, %v588
        %v591 = vmul.f32 %v585, %v588
        %v592 = vadd.f32 %v562, %v590
        %v593 = vadd.f32 %v563, %v591
        %vm594 = vmand %vm566, %vm435
        %v595 = vsel %vm594, 1, 0
        %v596 = vperm.slane %v595, 0
        %v597 = vperm.slane %v595, 1
        %vm598 = vcmp.eq.s32.totalorder %v596, 1
        %vm599 = vcmp.eq.s32.totalorder %v597, 1
        %600 = vrot.lane.b32.xlu0 %v531, 112
        %v601 = vpop.permute.xlu0 %600
        %602 = vrot.lane.b32.xlu0 %v532, 112
        %v603 = vpop.permute.xlu0 %602
        %604 = vrot.lane.b32.xlu0 %v533, 112
        %v605 = vpop.permute.xlu0 %604
        %vm606 = vcmask 916480
        %v607 = vsel %vm606, %v601, %v603
        %v608 = vsel %vm606, %v603, %v605
        %v611 = vsel %vm598, %v607, 0.0
        %v612 = vsel %vm599, %v608, 0.0
        %613 = vset.pattern.permute.xlu0 7
        %614 = vperm.xlu0 %613, %v392
        %v615 = vpop.permute.xlu0 %614
        %v617 = vmul.f32 %v611, %v615
        %v618 = vmul.f32 %v612, %v615
        %v619 = vadd.f32 %v592, %v617
        %v620 = vadd.f32 %v593, %v618
        %vm621 = vmand %vm566, %vm465
        %v622 = vsel %vm621, 1, 0
        %v623 = vperm.slane %v622, 0
        %v624 = vperm.slane %v622, 1
        %vm625 = vcmp.eq.s32.totalorder %v623, 1
        %vm626 = vcmp.eq.s32.totalorder %v624, 1
        %627 = vrot.lane.b32.xlu0 %v531, 111
        %v628 = vpop.permute.xlu0 %627
        %629 = vrot.lane.b32.xlu0 %v532, 111
        %v630 = vpop.permute.xlu0 %629
        %631 = vrot.lane.b32.xlu0 %v533, 111
        %v632 = vpop.permute.xlu0 %631
        %vm633 = vcmask 908288
        %v634 = vsel %vm633, %v628, %v630
        %v635 = vsel %vm633, %v630, %v632
        %v638 = vsel %vm625, %v634, 0.0
        %v639 = vsel %vm626, %v635, 0.0
        %640 = vset.pattern.permute.xlu0 8
        %641 = vperm.xlu0 %640, %v392
        %v642 = vpop.permute.xlu0 %641
        %v644 = vmul.f32 %v638, %v642
        %v645 = vmul.f32 %v639, %v642
        %v646 = vadd.f32 %v619, %v644
        %v647 = vadd.f32 %v620, %v645
        %v648 = vld [vmem:[%s3] sm:$0xff]
        %650 = vset.pattern.permute.xlu0 0
        %651 = vperm.xlu0 %650, %v648
        %v652 = vpop.permute.xlu0 %651
        %v654 = vmul.f32 %v646, %v652
        %v655 = vmul.f32 %v647, %v652
        %v656 = vld [vmem:[%s4] sm:$0xff]
        %658 = vset.pattern.permute.xlu0 0
        %659 = vperm.xlu0 %658, %v656
        %v660 = vpop.permute.xlu0 %659
        %v662 = vadd.f32 %v654, %v660
        %v663 = vadd.f32 %v655, %v660
        %vm664 = vcmp.ge.f32.partialorder %v662, 0.0
        %vm665 = vcmp.ge.f32.partialorder %v663, 0.0
        %v666 = vld [vmem:[%s5] sm:$0xff]
        %668 = vset.pattern.permute.xlu0 0
        %669 = vperm.xlu0 %668, %v666
        %v670 = vpop.permute.xlu0 %669
        %v672 = vmul.f32 %v670, %v662
        %v673 = vmul.f32 %v670, %v663
        %v674 = vsel %vm664, %v662, %v672
        %v675 = vsel %vm665, %v663, %v673
        %v676 = vld [vmem:[%s10] sm:$0xff]
        %vm677 = vcmask 64512
        %v679 = vsel %vm677, %v676, 0
        %681 = vmatpush.msra.mxu0 0.0
        %682 = vmatpush.msra.mxu0 0.0
        %683 = vmatpush.msra.mxu0 0.0
        %684 = vmatpush.msra.mxu0 0.0
        %685 = vmatpush.msra.mxu0 0.0
        %686 = vmatpush.msra.mxu0 0.0
        %687 = vmatpush.msra.mxu0 0.0
        %688 = vmatpush.msra.mxu0 0.0
        %689 = vmatpush.msra.mxu0 0.0
        %690 = vmatpush.msra.mxu0 0.0
        %691 = vmatpush.msra.mxu0 0.0
        %692 = vmatpush.msra.mxu0 0.0
        %693 = vmatpush.msra.mxu0 0.0
        %694 = vmatpush.msra.mxu0 0.0
        %695 = vmatpush.msra.mxu0 0.0
        %696 = vmatpush.msra.mxu0 %v674
        %697 = vmatmul.f32.gmra.mxu0 %v679
        %v698 = vpop.f32.mrf.mxu0
        %v699 = vadd.f32 0.0, %v698
        %700 = vdwg.mxu0
        %701 = vmatpush.msra.mxu0 0.0
        %702 = vmatpush.msra.mxu0 0.0
        %703 = vmatpush.msra.mxu0 0.0
        %704 = vmatpush.msra.mxu0 0.0
        %705 = vmatpush.msra.mxu0 0.0
        %706 = vmatpush.msra.mxu0 0.0
        %707 = vmatpush.msra.mxu0 0.0
        %708 = vmatpush.msra.mxu0 0.0
        %709 = vmatpush.msra.mxu0 0.0
        %710 = vmatpush.msra.mxu0 0.0
        %711 = vmatpush.msra.mxu0 0.0
        %712 = vmatpush.msra.mxu0 0.0
        %713 = vmatpush.msra.mxu0 0.0
        %714 = vmatpush.msra.mxu0 0.0
        %715 = vmatpush.msra.mxu0 0.0
        %716 = vmatpush.msra.mxu0 %v675
        %717 = vmatmul.f32.gmra.mxu0 %v679
        %v718 = vpop.f32.mrf.mxu0
        %v719 = vadd.f32 0.0, %v718
        %720 = vdwg.mxu0
        %v721 = vadd.f32 %v699, %v719
        %722 = vadd.xlane.f32.xlu0 %v721
        %v723 = vpop.xlane.xlu0 %722
        %v724 = vmul.f32 %v723, 0.00390625
        %v725 = vsub.f32 0.0, %v724
        %v726 = vmul.f32 %v725, 1.442695
        %v727 = vpow.pop %v726
        %v728 = vadd.f32 %v727, 1.0
        %v729 = vrcp.pop %v728
        %v730 = vmul.f32 %v728, %v729
        %v731 = vsub.f32 1.0, %v730
        %v732 = vmul.f32 %v729, %v731
        %v733 = vadd.f32 %v729, %v732
        %vm734 = vweird.f32 %v728
        %vm735 = vweird.f32 %v729
        %vm736 = vmor %vm734, %vm735
        %v737 = vsel %vm736, %v729, %v733
        %v738 = vand.u32 2147483647, %v728
        %vm739 = vcmp.eq.f32.partialorder %v738, 8.507059e+37
        %v740 = vand.u32 %v728, 2147483648
        %v741 = vor.u32 1.1754944e-38, %v740
        %v742 = vsel %vm739, %v741, %v737
        %v743 = vmul.f32 1.0, %v742
        %744 = vst [vmem:[#allocation2 + $0x8] sm:$0xff] %v674
        %745 = vst [vmem:[#allocation2 + $0x10] sm:$0xff] %v675
        %v746 = vld [vmem:[%s6] sm:$0xff]
        %v747 = vld [vmem:[#allocation2] sm:$0xff]
        %v748 = vld [vmem:[#allocation2 + $0x8] sm:$0xff]
        %v749 = vld [vmem:[#allocation2 + $0x10] sm:$0xff]
        %753 = vrot.lane.b32.xlu0 %v747, 17
        %v754 = vpop.permute.xlu0 %753
        %755 = vrot.lane.b32.xlu0 %v748, 17
        %v756 = vpop.permute.xlu0 %755
        %757 = vrot.lane.b32.xlu0 %v749, 17
        %v758 = vpop.permute.xlu0 %757
        %v759 = vsel %vm417, %v754, %v756
        %v760 = vsel %vm417, %v756, %v758
        %v763 = vsel %vm406, %v759, 0.0
        %v764 = vsel %vm407, %v760, 0.0
        %s765 = scalar_lea.vmem %s6, 8
        %v766 = vld [vmem:[%s765] sm:$0xff]
        %767 = vrot.lane.b32.xlu0 %v747, 16
        %v768 = vpop.permute.xlu0 %767
        %769 = vrot.lane.b32.xlu0 %v748, 16
        %v770 = vpop.permute.xlu0 %769
        %771 = vrot.lane.b32.xlu0 %v749, 16
        %v772 = vpop.permute.xlu0 %771
        %v773 = vsel %vm448, %v768, %v770
        %v774 = vsel %vm448, %v770, %v772
        %v777 = vsel %vm440, %v773, 0.0
        %v778 = vsel %vm441, %v774, 0.0
        %v780 = vsel %vm677, %v766, 0
        %782 = vmatpush.msra.mxu0 0.0
        %783 = vmatpush.msra.mxu0 0.0
        %784 = vmatpush.msra.mxu0 0.0
        %785 = vmatpush.msra.mxu0 0.0
        %786 = vmatpush.msra.mxu0 0.0
        %787 = vmatpush.msra.mxu0 0.0
        %788 = vmatpush.msra.mxu0 0.0
        %789 = vmatpush.msra.mxu0 0.0
        %790 = vmatpush.msra.mxu0 0.0
        %791 = vmatpush.msra.mxu0 0.0
        %792 = vmatpush.msra.mxu0 0.0
        %793 = vmatpush.msra.mxu0 0.0
        %794 = vmatpush.msra.mxu0 0.0
        %795 = vmatpush.msra.mxu0 0.0
        %796 = vmatpush.msra.mxu0 0.0
        %797 = vmatpush.msra.mxu0 %v777
        %798 = vmatmul.f32.gmra.mxu0 %v780
        %v799 = vpop.f32.mrf.mxu0
        %v800 = vadd.f32 0.0, %v799
        %801 = vdwg.mxu0
        %802 = vmatpush.msra.mxu0 0.0
        %803 = vmatpush.msra.mxu0 0.0
        %804 = vmatpush.msra.mxu0 0.0
        %805 = vmatpush.msra.mxu0 0.0
        %806 = vmatpush.msra.mxu0 0.0
        %807 = vmatpush.msra.mxu0 0.0
        %808 = vmatpush.msra.mxu0 0.0
        %809 = vmatpush.msra.mxu0 0.0
        %810 = vmatpush.msra.mxu0 0.0
        %811 = vmatpush.msra.mxu0 0.0
        %812 = vmatpush.msra.mxu0 0.0
        %813 = vmatpush.msra.mxu0 0.0
        %814 = vmatpush.msra.mxu0 0.0
        %815 = vmatpush.msra.mxu0 0.0
        %816 = vmatpush.msra.mxu0 0.0
        %817 = vmatpush.msra.mxu0 %v778
        %818 = vmatmul.f32.gmra.mxu0 %v780
        %v819 = vpop.f32.mrf.mxu0
        %v820 = vadd.f32 0.0, %v819
        %821 = vdwg.mxu0
        %v823 = vsel %vm677, %v746, 0
        %825 = vmatpush.msra.mxu0 0.0
        %826 = vmatpush.msra.mxu0 0.0
        %827 = vmatpush.msra.mxu0 0.0
        %828 = vmatpush.msra.mxu0 0.0
        %829 = vmatpush.msra.mxu0 0.0
        %830 = vmatpush.msra.mxu0 0.0
        %831 = vmatpush.msra.mxu0 0.0
        %832 = vmatpush.msra.mxu0 0.0
        %833 = vmatpush.msra.mxu0 0.0
        %834 = vmatpush.msra.mxu0 0.0
        %835 = vmatpush.msra.mxu0 0.0
        %836 = vmatpush.msra.mxu0 0.0
        %837 = vmatpush.msra.mxu0 0.0
        %838 = vmatpush.msra.mxu0 0.0
        %839 = vmatpush.msra.mxu0 0.0
        %840 = vmatpush.msra.mxu0 %v763
        %841 = vmatmul.f32.gmra.mxu0 %v823
        %v842 = vpop.f32.mrf.mxu0
        %v843 = vadd.f32 %v800, %v842
        %844 = vdwg.mxu0
        %845 = vmatpush.msra.mxu0 0.0
        %846 = vmatpush.msra.mxu0 0.0
        %847 = vmatpush.msra.mxu0 0.0
        %848 = vmatpush.msra.mxu0 0.0
        %849 = vmatpush.msra.mxu0 0.0
        %850 = vmatpush.msra.mxu0 0.0
        %851 = vmatpush.msra.mxu0 0.0
        %852 = vmatpush.msra.mxu0 0.0
        %853 = vmatpush.msra.mxu0 0.0
        %854 = vmatpush.msra.mxu0 0.0
        %855 = vmatpush.msra.mxu0 0.0
        %856 = vmatpush.msra.mxu0 0.0
        %857 = vmatpush.msra.mxu0 0.0
        %858 = vmatpush.msra.mxu0 0.0
        %859 = vmatpush.msra.mxu0 0.0
        %860 = vmatpush.msra.mxu0 %v764
        %861 = vmatmul.f32.gmra.mxu0 %v823
        %v862 = vpop.f32.mrf.mxu0
        %v863 = vadd.f32 %v820, %v862
        %864 = vdwg.mxu0
        %s865 = scalar_lea.vmem %s6, 16
        %v866 = vld [vmem:[%s865] sm:$0xff]
        %867 = vrot.lane.b32.xlu0 %v747, 15
        %v868 = vpop.permute.xlu0 %867
        %869 = vrot.lane.b32.xlu0 %v748, 15
        %v870 = vpop.permute.xlu0 %869
        %871 = vrot.lane.b32.xlu0 %v749, 15
        %v872 = vpop.permute.xlu0 %871
        %v873 = vsel %vm478, %v868, %v870
        %v874 = vsel %vm478, %v870, %v872
        %v877 = vsel %vm470, %v873, 0.0
        %v878 = vsel %vm471, %v874, 0.0
        %v880 = vsel %vm677, %v866, 0
        %882 = vmatpush.msra.mxu0 0.0
        %883 = vmatpush.msra.mxu0 0.0
        %884 = vmatpush.msra.mxu0 0.0
        %885 = vmatpush.msra.mxu0 0.0
        %886 = vmatpush.msra.mxu0 0.0
        %887 = vmatpush.msra.mxu0 0.0
        %888 = vmatpush.msra.mxu0 0.0
        %889 = vmatpush.msra.mxu0 0.0
        %890 = vmatpush.msra.mxu0 0.0
        %891 = vmatpush.msra.mxu0 0.0
        %892 = vmatpush.msra.mxu0 0.0
        %893 = vmatpush.msra.mxu0 0.0
        %894 = vmatpush.msra.mxu0 0.0
        %895 = vmatpush.msra.mxu0 0.0
        %896 = vmatpush.msra.mxu0 0.0
        %897 = vmatpush.msra.mxu0 %v877
        %898 = vmatmul.f32.gmra.mxu0 %v880
        %v899 = vpop.f32.mrf.mxu0
        %v900 = vadd.f32 0.0, %v899
        %901 = vdwg.mxu0
        %902 = vmatpush.msra.mxu0 0.0
        %903 = vmatpush.msra.mxu0 0.0
        %904 = vmatpush.msra.mxu0 0.0
        %905 = vmatpush.msra.mxu0 0.0
        %906 = vmatpush.msra.mxu0 0.0
        %907 = vmatpush.msra.mxu0 0.0
        %908 = vmatpush.msra.mxu0 0.0
        %909 = vmatpush.msra.mxu0 0.0
        %910 = vmatpush.msra.mxu0 0.0
        %911 = vmatpush.msra.mxu0 0.0
        %912 = vmatpush.msra.mxu0 0.0
        %913 = vmatpush.msra.mxu0 0.0
        %914 = vmatpush.msra.mxu0 0.0
        %915 = vmatpush.msra.mxu0 0.0
        %916 = vmatpush.msra.mxu0 0.0
        %917 = vmatpush.msra.mxu0 %v878
        %918 = vmatmul.f32.gmra.mxu0 %v880
        %v919 = vpop.f32.mrf.mxu0
        %v920 = vadd.f32 0.0, %v919
        %921 = vdwg.mxu0
        %v922 = vadd.f32 %v843, %v900
        %v923 = vadd.f32 %v863, %v920
        %s924 = scalar_lea.vmem %s6, 24
        %v925 = vld [vmem:[%s924] sm:$0xff]
        %926 = vrot.lane.b32.xlu0 %v747, 1
        %v927 = vpop.permute.xlu0 %926
        %928 = vrot.lane.b32.xlu0 %v748, 1
        %v929 = vpop.permute.xlu0 %928
        %930 = vrot.lane.b32.xlu0 %v749, 1
        %v931 = vpop.permute.xlu0 %930
        %v932 = vsel %vm508, %v927, %v929
        %v933 = vsel %vm508, %v929, %v931
        %v936 = vsel %vm500, %v932, 0.0
        %v937 = vsel %vm501, %v933, 0.0
        %v939 = vsel %vm677, %v925, 0
        %941 = vmatpush.msra.mxu0 0.0
        %942 = vmatpush.msra.mxu0 0.0
        %943 = vmatpush.msra.mxu0 0.0
        %944 = vmatpush.msra.mxu0 0.0
        %945 = vmatpush.msra.mxu0 0.0
        %946 = vmatpush.msra.mxu0 0.0
        %947 = vmatpush.msra.mxu0 0.0
        %948 = vmatpush.msra.mxu0 0.0
        %949 = vmatpush.msra.mxu0 0.0
        %950 = vmatpush.msra.mxu0 0.0
        %951 = vmatpush.msra.mxu0 0.0
        %952 = vmatpush.msra.mxu0 0.0
        %953 = vmatpush.msra.mxu0 0.0
        %954 = vmatpush.msra.mxu0 0.0
        %955 = vmatpush.msra.mxu0 0.0
        %956 = vmatpush.msra.mxu0 %v936
        %957 = vmatmul.f32.gmra.mxu0 %v939
        %v958 = vpop.f32.mrf.mxu0
        %v959 = vadd.f32 0.0, %v958
        %960 = vdwg.mxu0
        %961 = vmatpush.msra.mxu0 0.0
        %962 = vmatpush.msra.mxu0 0.0
        %963 = vmatpush.msra.mxu0 0.0
        %964 = vmatpush.msra.mxu0 0.0
        %965 = vmatpush.msra.mxu0 0.0
        %966 = vmatpush.msra.mxu0 0.0
        %967 = vmatpush.msra.mxu0 0.0
        %968 = vmatpush.msra.mxu0 0.0
        %969 = vmatpush.msra.mxu0 0.0
        %970 = vmatpush.msra.mxu0 0.0
        %971 = vmatpush.msra.mxu0 0.0
        %972 = vmatpush.msra.mxu0 0.0
        %973 = vmatpush.msra.mxu0 0.0
        %974 = vmatpush.msra.mxu0 0.0
        %975 = vmatpush.msra.mxu0 0.0
        %976 = vmatpush.msra.mxu0 %v937
        %977 = vmatmul.f32.gmra.mxu0 %v939
        %v978 = vpop.f32.mrf.mxu0
        %v979 = vadd.f32 0.0, %v978
        %980 = vdwg.mxu0
        %v981 = vadd.f32 %v922, %v959
        %v982 = vadd.f32 %v923, %v979
        %s983 = scalar_lea.vmem %s6, 32
        %v984 = vld [vmem:[%s983] sm:$0xff]
        %v986 = vsel %vm677, %v984, 0
        %988 = vmatpush.msra.mxu0 0.0
        %989 = vmatpush.msra.mxu0 0.0
        %990 = vmatpush.msra.mxu0 0.0
        %991 = vmatpush.msra.mxu0 0.0
        %992 = vmatpush.msra.mxu0 0.0
        %993 = vmatpush.msra.mxu0 0.0
        %994 = vmatpush.msra.mxu0 0.0
        %995 = vmatpush.msra.mxu0 0.0
        %996 = vmatpush.msra.mxu0 0.0
        %997 = vmatpush.msra.mxu0 0.0
        %998 = vmatpush.msra.mxu0 0.0
        %999 = vmatpush.msra.mxu0 0.0
        %1000 = vmatpush.msra.mxu0 0.0
        %1001 = vmatpush.msra.mxu0 0.0
        %1002 = vmatpush.msra.mxu0 0.0
        %1003 = vmatpush.msra.mxu0 %v748
        %1004 = vmatmul.f32.gmra.mxu0 %v986
        %v1005 = vpop.f32.mrf.mxu0
        %v1006 = vadd.f32 0.0, %v1005
        %1007 = vdwg.mxu0
        %1008 = vmatpush.msra.mxu0 0.0
        %1009 = vmatpush.msra.mxu0 0.0
        %1010 = vmatpush.msra.mxu0 0.0
        %1011 = vmatpush.msra.mxu0 0.0
        %1012 = vmatpush.msra.mxu0 0.0
        %1013 = vmatpush.msra.mxu0 0.0
        %1014 = vmatpush.msra.mxu0 0.0
        %1015 = vmatpush.msra.mxu0 0.0
        %1016 = vmatpush.msra.mxu0 0.0
        %1017 = vmatpush.msra.mxu0 0.0
        %1018 = vmatpush.msra.mxu0 0.0
        %1019 = vmatpush.msra.mxu0 0.0
        %1020 = vmatpush.msra.mxu0 0.0
        %1021 = vmatpush.msra.mxu0 0.0
        %1022 = vmatpush.msra.mxu0 0.0
        %1023 = vmatpush.msra.mxu0 %v749
        %1024 = vmatmul.f32.gmra.mxu0 %v986
        %v1025 = vpop.f32.mrf.mxu0
        %v1026 = vadd.f32 0.0, %v1025
        %1027 = vdwg.mxu0
        %v1028 = vadd.f32 %v981, %v1006
        %v1029 = vadd.f32 %v982, %v1026
        %s1030 = scalar_lea.vmem %s6, 40
        %v1031 = vld [vmem:[%s1030] sm:$0xff]
        %v1032 = vld [vmem:[#allocation2 + $0x8] sm:$0xff]
        %v1033 = vld [vmem:[#allocation2 + $0x10] sm:$0xff]
        %v1034 = vld [vmem:[#allocation2 + $0x18] sm:$0xff]
        %1038 = vrot.lane.b32.xlu0 %v1032, 127
        %v1039 = vpop.permute.xlu0 %1038
        %1040 = vrot.lane.b32.xlu0 %v1033, 127
        %v1041 = vpop.permute.xlu0 %1040
        %1042 = vrot.lane.b32.xlu0 %v1034, 127
        %v1043 = vpop.permute.xlu0 %1042
        %v1044 = vsel %vm549, %v1039, %v1041
        %v1045 = vsel %vm549, %v1041, %v1043
        %v1048 = vsel %vm538, %v1044, 0.0
        %v1049 = vsel %vm539, %v1045, 0.0
        %v1051 = vsel %vm677, %v1031, 0
        %1053 = vmatpush.msra.mxu0 0.0
        %1054 = vmatpush.msra.mxu0 0.0
        %1055 = vmatpush.msra.mxu0 0.0
        %1056 = vmatpush.msra.mxu0 0.0
        %1057 = vmatpush.msra.mxu0 0.0
        %1058 = vmatpush.msra.mxu0 0.0
        %1059 = vmatpush.msra.mxu0 0.0
        %1060 = vmatpush.msra.mxu0 0.0
        %1061 = vmatpush.msra.mxu0 0.0
        %1062 = vmatpush.msra.mxu0 0.0
        %1063 = vmatpush.msra.mxu0 0.0
        %1064 = vmatpush.msra.mxu0 0.0
        %1065 = vmatpush.msra.mxu0 0.0
        %1066 = vmatpush.msra.mxu0 0.0
        %1067 = vmatpush.msra.mxu0 0.0
        %1068 = vmatpush.msra.mxu0 %v1048
        %1069 = vmatmul.f32.gmra.mxu0 %v1051
        %v1070 = vpop.f32.mrf.mxu0
        %v1071 = vadd.f32 0.0, %v1070
        %1072 = vdwg.mxu0
        %1073 = vmatpush.msra.mxu0 0.0
        %1074 = vmatpush.msra.mxu0 0.0
        %1075 = vmatpush.msra.mxu0 0.0
        %1076 = vmatpush.msra.mxu0 0.0
        %1077 = vmatpush.msra.mxu0 0.0
        %1078 = vmatpush.msra.mxu0 0.0
        %1079 = vmatpush.msra.mxu0 0.0
        %1080 = vmatpush.msra.mxu0 0.0
        %1081 = vmatpush.msra.mxu0 0.0
        %1082 = vmatpush.msra.mxu0 0.0
        %1083 = vmatpush.msra.mxu0 0.0
        %1084 = vmatpush.msra.mxu0 0.0
        %1085 = vmatpush.msra.mxu0 0.0
        %1086 = vmatpush.msra.mxu0 0.0
        %1087 = vmatpush.msra.mxu0 0.0
        %1088 = vmatpush.msra.mxu0 %v1049
        %1089 = vmatmul.f32.gmra.mxu0 %v1051
        %v1090 = vpop.f32.mrf.mxu0
        %v1091 = vadd.f32 0.0, %v1090
        %1092 = vdwg.mxu0
        %v1093 = vadd.f32 %v1028, %v1071
        %v1094 = vadd.f32 %v1029, %v1091
        %s1095 = scalar_lea.vmem %s6, 48
        %v1096 = vld [vmem:[%s1095] sm:$0xff]
        %1097 = vrot.lane.b32.xlu0 %v1032, 113
        %v1098 = vpop.permute.xlu0 %1097
        %1099 = vrot.lane.b32.xlu0 %v1033, 113
        %v1100 = vpop.permute.xlu0 %1099
        %1101 = vrot.lane.b32.xlu0 %v1034, 113
        %v1102 = vpop.permute.xlu0 %1101
        %v1103 = vsel %vm579, %v1098, %v1100
        %v1104 = vsel %vm579, %v1100, %v1102
        %v1107 = vsel %vm571, %v1103, 0.0
        %v1108 = vsel %vm572, %v1104, 0.0
        %v1110 = vsel %vm677, %v1096, 0
        %1112 = vmatpush.msra.mxu0 0.0
        %1113 = vmatpush.msra.mxu0 0.0
        %1114 = vmatpush.msra.mxu0 0.0
        %1115 = vmatpush.msra.mxu0 0.0
        %1116 = vmatpush.msra.mxu0 0.0
        %1117 = vmatpush.msra.mxu0 0.0
        %1118 = vmatpush.msra.mxu0 0.0
        %1119 = vmatpush.msra.mxu0 0.0
        %1120 = vmatpush.msra.mxu0 0.0
        %1121 = vmatpush.msra.mxu0 0.0
        %1122 = vmatpush.msra.mxu0 0.0
        %1123 = vmatpush.msra.mxu0 0.0
        %1124 = vmatpush.msra.mxu0 0.0
        %1125 = vmatpush.msra.mxu0 0.0
        %1126 = vmatpush.msra.mxu0 0.0
        %1127 = vmatpush.msra.mxu0 %v1107
        %1128 = vmatmul.f32.gmra.mxu0 %v1110
        %v1129 = vpop.f32.mrf.mxu0
        %v1130 = vadd.f32 0.0, %v1129
        %1131 = vdwg.mxu0
        %1132 = vmatpush.msra.mxu0 0.0
        %1133 = vmatpush.msra.mxu0 0.0
        %1134 = vmatpush.msra.mxu0 0.0
        %1135 = vmatpush.msra.mxu0 0.0
        %1136 = vmatpush.msra.mxu0 0.0
        %1137 = vmatpush.msra.mxu0 0.0
        %1138 = vmatpush.msra.mxu0 0.0
        %1139 = vmatpush.msra.mxu0 0.0
        %1140 = vmatpush.msra.mxu0 0.0
        %1141 = vmatpush.msra.mxu0 0.0
        %1142 = vmatpush.msra.mxu0 0.0
        %1143 = vmatpush.msra.mxu0 0.0
        %1144 = vmatpush.msra.mxu0 0.0
        %1145 = vmatpush.msra.mxu0 0.0
        %1146 = vmatpush.msra.mxu0 0.0
        %1147 = vmatpush.msra.mxu0 %v1108
        %1148 = vmatmul.f32.gmra.mxu0 %v1110
        %v1149 = vpop.f32.mrf.mxu0
        %v1150 = vadd.f32 0.0, %v1149
        %1151 = vdwg.mxu0
        %v1152 = vadd.f32 %v1093, %v1130
        %v1153 = vadd.f32 %v1094, %v1150
        %s1154 = scalar_lea.vmem %s6, 56
        %v1155 = vld [vmem:[%s1154] sm:$0xff]
        %1156 = vrot.lane.b32.xlu0 %v1032, 112
        %v1157 = vpop.permute.xlu0 %1156
        %1158 = vrot.lane.b32.xlu0 %v1033, 112
        %v1159 = vpop.permute.xlu0 %1158
        %1160 = vrot.lane.b32.xlu0 %v1034, 112
        %v1161 = vpop.permute.xlu0 %1160
        %v1162 = vsel %vm606, %v1157, %v1159
        %v1163 = vsel %vm606, %v1159, %v1161
        %v1166 = vsel %vm598, %v1162, 0.0
        %v1167 = vsel %vm599, %v1163, 0.0
        %v1169 = vsel %vm677, %v1155, 0
        %1171 = vmatpush.msra.mxu0 0.0
        %1172 = vmatpush.msra.mxu0 0.0
        %1173 = vmatpush.msra.mxu0 0.0
        %1174 = vmatpush.msra.mxu0 0.0
        %1175 = vmatpush.msra.mxu0 0.0
        %1176 = vmatpush.msra.mxu0 0.0
        %1177 = vmatpush.msra.mxu0 0.0
        %1178 = vmatpush.msra.mxu0 0.0
        %1179 = vmatpush.msra.mxu0 0.0
        %1180 = vmatpush.msra.mxu0 0.0
        %1181 = vmatpush.msra.mxu0 0.0
        %1182 = vmatpush.msra.mxu0 0.0
        %1183 = vmatpush.msra.mxu0 0.0
        %1184 = vmatpush.msra.mxu0 0.0
        %1185 = vmatpush.msra.mxu0 0.0
        %1186 = vmatpush.msra.mxu0 %v1166
        %1187 = vmatmul.f32.gmra.mxu0 %v1169
        %v1188 = vpop.f32.mrf.mxu0
        %v1189 = vadd.f32 0.0, %v1188
        %1190 = vdwg.mxu0
        %1191 = vmatpush.msra.mxu0 0.0
        %1192 = vmatpush.msra.mxu0 0.0
        %1193 = vmatpush.msra.mxu0 0.0
        %1194 = vmatpush.msra.mxu0 0.0
        %1195 = vmatpush.msra.mxu0 0.0
        %1196 = vmatpush.msra.mxu0 0.0
        %1197 = vmatpush.msra.mxu0 0.0
        %1198 = vmatpush.msra.mxu0 0.0
        %1199 = vmatpush.msra.mxu0 0.0
        %1200 = vmatpush.msra.mxu0 0.0
        %1201 = vmatpush.msra.mxu0 0.0
        %1202 = vmatpush.msra.mxu0 0.0
        %1203 = vmatpush.msra.mxu0 0.0
        %1204 = vmatpush.msra.mxu0 0.0
        %1205 = vmatpush.msra.mxu0 0.0
        %1206 = vmatpush.msra.mxu0 %v1167
        %1207 = vmatmul.f32.gmra.mxu0 %v1169
        %v1208 = vpop.f32.mrf.mxu0
        %v1209 = vadd.f32 0.0, %v1208
        %1210 = vdwg.mxu0
        %v1211 = vadd.f32 %v1152, %v1189
        %v1212 = vadd.f32 %v1153, %v1209
        %s1213 = scalar_lea.vmem %s6, 64
        %v1214 = vld [vmem:[%s1213] sm:$0xff]
        %1215 = vrot.lane.b32.xlu0 %v1032, 111
        %v1216 = vpop.permute.xlu0 %1215
        %1217 = vrot.lane.b32.xlu0 %v1033, 111
        %v1218 = vpop.permute.xlu0 %1217
        %1219 = vrot.lane.b32.xlu0 %v1034, 111
        %v1220 = vpop.permute.xlu0 %1219
        %v1221 = vsel %vm633, %v1216, %v1218
        %v1222 = vsel %vm633, %v1218, %v1220
        %v1225 = vsel %vm625, %v1221, 0.0
        %v1226 = vsel %vm626, %v1222, 0.0
        %v1228 = vsel %vm677, %v1214, 0
        %1230 = vmatpush.msra.mxu0 0.0
        %1231 = vmatpush.msra.mxu0 0.0
        %1232 = vmatpush.msra.mxu0 0.0
        %1233 = vmatpush.msra.mxu0 0.0
        %1234 = vmatpush.msra.mxu0 0.0
        %1235 = vmatpush.msra.mxu0 0.0
        %1236 = vmatpush.msra.mxu0 0.0
        %1237 = vmatpush.msra.mxu0 0.0
        %1238 = vmatpush.msra.mxu0 0.0
        %1239 = vmatpush.msra.mxu0 0.0
        %1240 = vmatpush.msra.mxu0 0.0
        %1241 = vmatpush.msra.mxu0 0.0
        %1242 = vmatpush.msra.mxu0 0.0
        %1243 = vmatpush.msra.mxu0 0.0
        %1244 = vmatpush.msra.mxu0 0.0
        %1245 = vmatpush.msra.mxu0 %v1225
        %1246 = vmatmul.f32.gmra.mxu0 %v1228
        %v1247 = vpop.f32.mrf.mxu0
        %v1248 = vadd.f32 0.0, %v1247
        %1249 = vdwg.mxu0
        %1250 = vmatpush.msra.mxu0 0.0
        %1251 = vmatpush.msra.mxu0 0.0
        %1252 = vmatpush.msra.mxu0 0.0
        %1253 = vmatpush.msra.mxu0 0.0
        %1254 = vmatpush.msra.mxu0 0.0
        %1255 = vmatpush.msra.mxu0 0.0
        %1256 = vmatpush.msra.mxu0 0.0
        %1257 = vmatpush.msra.mxu0 0.0
        %1258 = vmatpush.msra.mxu0 0.0
        %1259 = vmatpush.msra.mxu0 0.0
        %1260 = vmatpush.msra.mxu0 0.0
        %1261 = vmatpush.msra.mxu0 0.0
        %1262 = vmatpush.msra.mxu0 0.0
        %1263 = vmatpush.msra.mxu0 0.0
        %1264 = vmatpush.msra.mxu0 0.0
        %1265 = vmatpush.msra.mxu0 %v1226
        %1266 = vmatmul.f32.gmra.mxu0 %v1228
        %v1267 = vpop.f32.mrf.mxu0
        %v1268 = vadd.f32 0.0, %v1267
        %1269 = vdwg.mxu0
        %v1270 = vadd.f32 %v1211, %v1248
        %v1271 = vadd.f32 %v1212, %v1268
        %v1272 = vld [vmem:[%s7] sm:$0xff]
        %1274 = vset.pattern.permute.xlu0 0
        %1275 = vperm.xlu0 %1274, %v1272
        %v1276 = vpop.permute.xlu0 %1275
        %v1278 = vmul.f32 %v1270, %v1276
        %v1279 = vmul.f32 %v1271, %v1276
        %v1280 = vld [vmem:[%s8] sm:$0xff]
        %1282 = vset.pattern.permute.xlu0 0
        %1283 = vperm.xlu0 %1282, %v1280
        %v1284 = vpop.permute.xlu0 %1283
        %v1286 = vadd.f32 %v1278, %v1284
        %v1287 = vadd.f32 %v1279, %v1284
        %vm1288 = vcmp.ge.f32.partialorder %v1286, 0.0
        %vm1289 = vcmp.ge.f32.partialorder %v1287, 0.0
        %v1290 = vld [vmem:[%s9] sm:$0xff]
        %1292 = vset.pattern.permute.xlu0 0
        %1293 = vperm.xlu0 %1292, %v1290
        %v1294 = vpop.permute.xlu0 %1293
        %v1296 = vmul.f32 %v1294, %v1286
        %v1297 = vmul.f32 %v1294, %v1287
        %v1298 = vsel %vm1288, %v1286, %v1296
        %v1299 = vsel %vm1289, %v1287, %v1297
        %v1300 = vmul.f32 %v1298, %v743
        %v1301 = vmul.f32 %v1299, %v743
        %1302 = vst [vmem:[%s379] sm:$0xff] %v1300
        %1303 = vst [vmem:[%s379 + $0x8] sm:$0xff] %v1301
        %s1304 = sand.u32 %s269, 1
        %s1305 = scalar_lea.sflag [#allocation4], %s1304
        %s1306 = sand.u32 %s269, 1
        %s1307 = smul.addr %s1306, 16
        %s1308 = scalar_lea.vmem [#allocation3], %s1307
        // Predicated region
        $region65: #{tpu_custom_call.1} parent=63 // pred_check
          %p1309 = pneg %p279
        $region66: #{tpu_custom_call.1} parent=63 // pred_check_branch
          %1311 = sbr.rel (%p1309) target = $region68
        $region67: #{tpu_custom_call.1} parent=63 // pred_region
          %1313 = vsyncadd %s1305, 0
          %s1314 = smul.addr %s25, 2
          %s1315 = smul.addr %s1314, 8
          %s1316 = scalar_lea.hbm %s11, %s1315
          %s1318 = sshll.u32 %s1308, 4
          %s1319 = int_to_ptr.vmem [resolvable:$true] %s1318
          %s1320 = sshll.u32 %s1316, 4
          %s1321 = int_to_ptr.hbm [resolvable:$true] %s1320
          %1323 = dma.vmem_to_hbm [thread:$0]  %s1319, 256, %s1321, %s1305
        $region68: #{tpu_custom_call.1} parent=63 // pred_fallthru
          _
      $region64: #{tpu_custom_call.1} parent=5 // pred_fallthru
        _
      %p1324 = scmp.le.s32.totalorder 2, %s20
      // Predicated region
      $region69: #{tpu_custom_call.1} parent=5 // pred_check
        %p1325 = pneg %p1324
      $region70: #{tpu_custom_call.1} parent=5 // pred_check_branch
        %1327 = sbr.rel (%p1325) target = $region72
      $region71: #{tpu_custom_call.1} parent=5 // pred_region
        %s1328 = ssub.s32 %s20, 2
        // Predicated region
        $region73: #{tpu_custom_call.1} parent=71 // pred_check
          %p1329 = pneg %p285
        $region74: #{tpu_custom_call.1} parent=71 // pred_check_branch
          %1331 = sbr.rel (%p1329) target = $region76
        $region75: #{tpu_custom_call.1} parent=71 // pred_region
          %s1332 = sand.u32 %s270, 1
          %s1333 = scalar_lea.sflag [#allocation4], %s1332
          %s1334 = sand.u32 %s270, 1
          %s1335 = smul.addr %s1334, 16
          %s1336 = scalar_lea.vmem [#allocation3], %s1335
          %1338 = dma.done %s1333, 256
        $region76: #{tpu_custom_call.1} parent=71 // pred_fallthru
          _
      $region72: #{tpu_custom_call.1} parent=5 // pred_fallthru
        _
    $region6: #{tpu_custom_call.1} parent=1 // loop_footer
      %s24 = sadd.s32 1, %s20
    $region7: #{tpu_custom_call.1} parent=1 // loop_footer_branch
      %19 = sbr.rel target = $region3
    $region8: #{tpu_custom_call.1} parent=1 // loop_exit
      _
    %1339 = vsyncpa [#allocation4], 1
    %s1340 = scalar_lea.sflag [#allocation4], 1
    %1341 = vsyncpa %s1340, 1

</llo_original>
